<compile_context>
chip_gen: v7x
topology: tpu7x:2x2x1
jax: 0.10.0
libtpu: 0.0.40
codegen_flags: <defaults>
</compile_context>

<pallas_src>
import jax
import jax.numpy as jnp
from jax import lax
from jax.experimental import pallas as pl
from jax.experimental.pallas import tpu as pltpu


def _ceil_to(x, m):
    return -(-int(x) // int(m)) * int(m)


def _make_fp_kernel(num_layers, has_points1, S, matmul_dtype):
    mdt = jnp.dtype(matmul_dtype)
    exact = mdt == jnp.dtype(jnp.float32)
    # Bits needed to pack a sampled-point index 0..S-1 into the low mantissa bits of the
    # f32 squared distance (fused min+argmin).  Costs at most 2^-(23-idx_bits) relative
    # error on the selected distances; ties still break towards the smallest index.
    idx_bits = max(1, int(S - 1).bit_length())
    idx_mask = (1 << idx_bits) - 1

    def kernel(*refs):
        i = 0
        xyz1_ref = refs[i]; i += 1            # (1, C+2, TN) f32: rows [xyz; |xyz|^2; 1]
        xyz2_ref = refs[i]; i += 1            # (1, S, C+2) f32: cols [-2*xyz; 1; |xyz|^2]
        if has_points1:
            p1_ref = refs[i]; i += 1          # (1, D1, TN) matmul dtype
        p2_ref = refs[i]; i += 1              # (1, D2, S)  matmul dtype
        layers = []
        for li in range(num_layers):
            if li == 0 and has_points1:
                layers.append((refs[i], refs[i + 1], refs[i + 2]))  # W_p1, W_interp, shift
                i += 3
            else:
                layers.append((refs[i], refs[i + 1]))               # W, shift
                i += 2
        out_ref = refs[i]                     # (1, d_out, TN) f32

        tn = out_ref.shape[2]
        p2 = p2_ref[0]                        # [D2, S]

        if S == 1:
            # torch fast path: interpolated_points = points2.repeat(1, N, 1)
            interp = jnp.broadcast_to(p2, (p2.shape[0], tn))
        else:
            # ---- squared distances, epilogue folded into the MXU matmul ----
            # d[s, n] = sum_c aug2[s, c] * aug1[c, n]
            #         = -2<xyz2_s, xyz1_n> + |xyz1_n|^2 + |xyz2_s|^2
            d = jnp.dot(xyz2_ref[0], xyz1_ref[0],
                        preferred_element_type=jnp.float32)          # [S, TN] f32
            # True squared distances are >= 0; clamp f32 rounding noise so the int32 bit
            # patterns below are monotone in the value.  Selection math stays f32.
            d = jnp.maximum(d, 0.0)

            # ---- fused 3x (min + argmin) over the sublane (S) axis ----
            row = lax.broadcasted_iota(jnp.int32, d.shape, 0)        # [S, TN]
            hi = jnp.int32(~idx_mask)
            key = (pltpu.bitcast(d, jnp.int32) & hi) | row           # [S, TN] int32
            imax = jnp.int32(2**31 - 1)

            k1 = jnp.min(key, axis=0, keepdims=True)                 # [1, TN]
            eq1 = key == k1
            key = jnp.where(eq1, imax, key)
            k2 = jnp.min(key, axis=0, keepdims=True)
            eq2 = key == k2
            key = jnp.where(eq2, imax, key)
            k3 = jnp.min(key, axis=0, keepdims=True)
            eq3 = key == k3

            m1 = pltpu.bitcast(k1 & hi, jnp.float32)                 # truncated distances
            m2 = pltpu.bitcast(k2 & hi, jnp.float32)
            m3 = pltpu.bitcast(k3 & hi, jnp.float32)

            if exact:
                r1 = 1.0 / (m1 + 1e-8)
                r2 = 1.0 / (m2 + 1e-8)
                r3 = 1.0 / (m3 + 1e-8)
                inv_norm = 1.0 / (r1 + r2 + r3)
            else:
                # EUP approx reciprocals (separate issue slot); gated off the f32 path.
                r1 = pl.reciprocal(m1 + 1e-8, approx=True)
                r2 = pl.reciprocal(m2 + 1e-8, approx=True)
                r3 = pl.reciprocal(m3 + 1e-8, approx=True)
                inv_norm = pl.reciprocal(r1 + r2 + r3, approx=True)
            w1 = r1 * inv_norm
            w2 = r2 * inv_norm
            w3 = r3 * inv_norm

            # Gather-by-selection-matrix: wmat[s, n] = weight of sampled point s for query n.
            wmat = (jnp.where(eq1, w1, 0.0)
                    + jnp.where(eq2, w2, 0.0)
                    + jnp.where(eq3, w3, 0.0))                       # [S, TN] f32
            interp = jnp.dot(p2, wmat.astype(mdt),
                             preferred_element_type=jnp.float32)     # [D2, TN] f32

        # ---- shared MLP: 1x1 conv == matmul (channels-first), folded BN, ReLU ----
        if has_points1:
            w0a, w0b, sh0 = layers[0]
            # Split-weight form of concat([points1, interp], channel) @ W0.
            y = (jnp.dot(w0a[...], p1_ref[0], preferred_element_type=jnp.float32)
                 + jnp.dot(w0b[...], interp.astype(mdt),
                           preferred_element_type=jnp.float32))
        else:
            w0, sh0 = layers[0]
            y = jnp.dot(w0[...], interp.astype(mdt),
                        preferred_element_type=jnp.float32)
        x = jnp.maximum(y + sh0[...], 0.0).astype(mdt)
        for (w_ref, sh_ref) in layers[1:]:
            y = jnp.dot(w_ref[...], x, preferred_element_type=jnp.float32)
            x = jnp.maximum(y + sh_ref[...], 0.0).astype(mdt)
        out_ref[0] = x.astype(out_ref.dtype)

    return kernel


def _vmem_capacity_bytes():
    """Per-core VMEM capacity; falls back to 128 MiB (v5e/v6e) if the query fails."""
    try:
        info = pltpu.get_tpu_info()
        cap = getattr(info, "vmem_capacity_bytes", None)
        if cap:
            return int(cap)
    except Exception:
        pass
    return 128 * 1024 * 1024


def _padded_block_bytes(shape, dtype):
    """Bytes of one VMEM buffer for a block, with (sublane, lane) tiling padding."""
    itemsize = jnp.dtype(dtype).itemsize
    dims = list(shape)
    if len(dims) >= 1:
        dims[-1] = _ceil_to(dims[-1], 128)
    if len(dims) >= 2:
        dims[-2] = _ceil_to(dims[-2], 8 * max(1, 4 // itemsize))
    n = 1
    for d in dims:
        n *= int(d)
    return n * itemsize


def pointnet_fp_forward(xyz1, xyz2, points1, points2, params, *,
                        tile_n=None, matmul_dtype=jnp.float32):
    """xyz1 [B,C,N], xyz2 [B,C,S], points1 [B,D1,N] or None, points2 [B,D2,S].

    params: list of (W [Cout,Cin], scale [Cout], shift [Cout]) per MLP layer
            (BatchNorm already folded into scale/shift, inference form).
    matmul_dtype: jnp.float32 (near-exact) or jnp.bfloat16 (MXU path, recommended on
            v5e/v6e/v7x; 3-NN selection and interpolation weights stay f32 either way).
    Returns [B, D_out, N] (PyTorch layout), float32.
    """
    B, C, N = xyz1.shape
    S = xyz2.shape[2]
    D2 = points2.shape[1]
    has_points1 = points1 is not None
    D1 = points1.shape[1] if has_points1 else 0
    if S == 2:
        raise ValueError("S must be 1 or >= 3 (3-NN interpolation), as in the torch module")
    mdt = jnp.dtype(matmul_dtype)
    d_out = params[-1][0].shape[0]
    max_c = max(max(w.shape[0] for (w, _, _) in params), D2)

    # ---- padding-aware VMEM estimate for a candidate tile size ----
    def block_list(tn):
        bl = [((1, C + 2, tn), jnp.float32),       # xyz1 augmented (N-tiled)
              ((1, S, C + 2), jnp.float32)]        # xyz2 augmented (resident)
        if has_points1:
            bl.append(((1, D1, tn), mdt))          # points1 (N-tiled)
        bl.append(((1, D2, S), mdt))               # points2 (resident)
        for li, (w, _, _) in enumerate(params):
            cout, cin = w.shape
            if li == 0 and has_points1:
                bl += [((cout, D1), mdt), ((cout, cin - D1), mdt)]
            else:
                bl += [((cout, cin), mdt)]
            bl += [((cout, 1), jnp.float32)]
        bl.append(((1, d_out, tn), jnp.float32))   # output (N-tiled)
        return bl

    def vmem_estimate(tn):
        bufs = sum(2 * _padded_block_bytes(s, dt) for s, dt in block_list(tn))  # dbl-buffered
        temps = 10 * _ceil_to(max(S, 8), 8) * _ceil_to(tn, 128) * 4             # d/key/masks/wmat
        temps += 4 * _ceil_to(max_c, 8) * _ceil_to(tn, 128) * 4                 # activations
        return bufs + temps

    cap = _vmem_capacity_bytes()
    if tile_n is None:
        budget = int(0.55 * cap)    # headroom for Mosaic internal scratch on 64 MiB parts
        cands = [c for c in (1024, 512, 256, 128)
                 if N % c == 0 and vmem_estimate(c) <= budget]
        if B == 1:
            # Megacore (v7x): prefer >= 2 N-tiles so the core split lands on the N axis.
            multi = [c for c in cands if N // c >= 2]
            cands = multi or cands
        tile_n = cands[0] if cands else N
    if N % tile_n != 0 or (tile_n != N and tile_n % 128 != 0):
        raise ValueError(f"tile_n={tile_n} must divide N={N} and be a multiple of 128")

    # ---- wrapper-side channel augmentation: folds -2ab + |a|^2 + |b|^2 into one matmul ----
    xyz1_f = xyz1.astype(jnp.float32)
    xyz2_t = jnp.transpose(xyz2.astype(jnp.float32), (0, 2, 1))                   # [B,S,C]
    sq1 = jnp.sum(xyz1_f * xyz1_f, axis=1, keepdims=True)                         # [B,1,N]
    sq2 = jnp.sum(xyz2_t * xyz2_t, axis=2, keepdims=True)                         # [B,S,1]
    xyz1_aug = jnp.concatenate([xyz1_f, sq1, jnp.ones_like(sq1)], axis=1)         # [B,C+2,N]
    xyz2_aug = jnp.concatenate([-2.0 * xyz2_t, jnp.ones_like(sq2), sq2], axis=2)  # [B,S,C+2]

    inputs = [xyz1_aug, xyz2_aug]
    in_specs = [
        pl.BlockSpec((1, C + 2, tile_n), lambda b, n: (b, 0, n)),
        pl.BlockSpec((1, S, C + 2), lambda b, n: (b, 0, 0)),    # resident per batch element
    ]
    if has_points1:
        inputs.append(points1.astype(mdt))                      # cast once in the wrapper
        in_specs.append(pl.BlockSpec((1, D1, tile_n), lambda b, n: (b, 0, n)))
    inputs.append(points2.astype(mdt))
    in_specs.append(pl.BlockSpec((1, D2, S), lambda b, n: (b, 0, 0)))

    def const_spec(shape):
        nd = len(shape)
        return pl.BlockSpec(shape, lambda b, n: (0,) * nd)

    for li, (w, scale, shift) in enumerate(params):
        cout, cin = w.shape
        wf = (w * scale[:, None]).astype(mdt)                   # fold BN scale into conv weight
        sh = shift.reshape(cout, 1).astype(jnp.float32)
        if li == 0 and has_points1:
            inputs += [wf[:, :D1], wf[:, D1:], sh]
            in_specs += [const_spec((cout, D1)),
                         const_spec((cout, cin - D1)),
                         const_spec((cout, 1))]
        else:
            inputs += [wf, sh]
            in_specs += [const_spec((cout, cin)), const_spec((cout, 1))]

    vmem_limit = int(min(max(2 * vmem_estimate(tile_n), 32 * 1024 * 1024),
                         int(0.75 * cap)))

    out = pl.pallas_call(
        _make_fp_kernel(len(params), has_points1, S, mdt),
        out_shape=jax.ShapeDtypeStruct((B, d_out, N), jnp.float32),
        grid=(B, N // tile_n),
        in_specs=in_specs,
        out_specs=pl.BlockSpec((1, d_out, tile_n), lambda b, n: (b, 0, n)),
        compiler_params=pltpu.CompilerParams(
            dimension_semantics=("parallel", "parallel"),
            vmem_limit_bytes=vmem_limit,
        ),
    )(*inputs)
    return out                                                   # [B, D_out, N]


def init_params(key, in_channel, mlp):
    """Deterministic Conv1d(k=1) + BatchNorm1d params, BN folded into scale/shift."""
    params = []
    last = in_channel
    for out_c in mlp:
        key, k1, k2, k3, k4, k5, k6 = jax.random.split(key, 7)
        w = 0.1 * jax.random.normal(k1, (out_c, last), jnp.float32)     # conv weight [Cout,Cin]
        b = 0.1 * jax.random.normal(k2, (out_c,), jnp.float32)          # conv bias
        gamma = 1.0 + 0.1 * jax.random.normal(k3, (out_c,), jnp.float32)
        beta = 0.1 * jax.random.normal(k4, (out_c,), jnp.float32)
        mean = 0.1 * jax.random.normal(k5, (out_c,), jnp.float32)
        var = 0.5 + 0.1 * jnp.abs(jax.random.normal(k6, (out_c,), jnp.float32))
        s = gamma / jnp.sqrt(var + 1e-5)
        scale = s
        shift = s * (b - mean) + beta
        params.append((w, scale, shift))
        last = out_c
    return params


def ref_forward(xyz1, xyz2, points1, points2, params):
    """Pure-JAX reference mirroring the PyTorch forward (inference-mode BN), f32."""
    xyz1_t = jnp.transpose(xyz1, (0, 2, 1))
    xyz2_t = jnp.transpose(xyz2, (0, 2, 1))
    p2_t = jnp.transpose(points2, (0, 2, 1))
    dist = (-2.0 * jnp.einsum("bnc,bsc->bns", xyz1_t, xyz2_t)
            + jnp.sum(xyz1_t ** 2, -1)[..., None]
            + jnp.sum(xyz2_t ** 2, -1)[:, None, :])
    idx = jnp.argsort(dist, axis=-1)[:, :, :3]
    d3 = jnp.take_along_axis(dist, idx, axis=-1)
    recip = 1.0 / (d3 + 1e-8)
    w = recip / jnp.sum(recip, -1, keepdims=True)
    gathered = jax.vmap(lambda pts, ix: pts[ix])(p2_t, idx)              # [B,N,3,D2]
    interp = jnp.sum(gathered * w[..., None], axis=2)                    # [B,N,D2]
    if points1 is not None:
        x = jnp.concatenate([jnp.transpose(points1, (0, 2, 1)), interp], axis=-1)
    else:
        x = interp
    for (w_l, scale, shift) in params:
        y = jnp.einsum("bnc,oc->bno", x, w_l) * scale[None, None, :] + shift[None, None, :]
        x = jnp.maximum(y, 0.0)
    return jnp.transpose(x, (0, 2, 1))


if __name__ == "__main__":
    B, N, S = 2, 256, 32
    C = 3            # xyz coordinate channels
    D1, D2 = 16, 32  # points1 / points2 feature channels
    mlp = [64, 32]

    key = jax.random.PRNGKey(0)
    k_xyz1, k_xyz2, k_p1, k_p2, k_params, k_p2b = jax.random.split(key, 6)
    xyz1 = jax.random.normal(k_xyz1, (B, C, N), jnp.float32)
    xyz2 = jax.random.normal(k_xyz2, (B, C, S), jnp.float32)
    points1 = jax.random.normal(k_p1, (B, D1, N), jnp.float32)
    points2 = jax.random.normal(k_p2, (B, D2, S), jnp.float32)

    params = init_params(k_params, D1 + D2, mlp)
    ref = ref_forward(xyz1, xyz2, points1, points2, params)

    # 1) f32 path, auto tile (exercises VMEM-/generation-aware tile pick): near-exact.
    #    (5e-4: distance matmul + small mantissa truncation of the fused argmin differ
    #     from XLA's reference rounding at the ~1e-5 level.)
    out_f32 = jax.block_until_ready(
        pointnet_fp_forward(xyz1, xyz2, points1, points2, params,
                            matmul_dtype=jnp.float32))
    assert out_f32.shape == (B, mlp[-1], N), out_f32.shape
    err = float(jnp.max(jnp.abs(out_f32 - ref)))
    assert jnp.allclose(out_f32, ref, atol=5e-4, rtol=5e-4), err

    # 2) bf16 MXU path (recommended on v5e/v6e/v7x), tile_n=128 to exercise the
    #    multi-N-tile grid: loose check.
    out_bf16 = jax.block_until_ready(
        pointnet_fp_forward(xyz1, xyz2, points1, points2, params,
                            tile_n=128, matmul_dtype=jnp.bfloat16))
    err_bf = float(jnp.max(jnp.abs(out_bf16 - ref)))
    assert jnp.allclose(out_bf16, ref, atol=6e-2, rtol=6e-2), err_bf

    # 3) S == 1 fast path (torch's points2.repeat branch) with points1=None.
    xyz2_s1 = jax.random.normal(k_xyz2, (B, C, 1), jnp.float32)
    points2_s1 = jax.random.normal(k_p2b, (B, D2, 1), jnp.float32)
    params_s1 = init_params(k_params, D2, [32, 16])
    ref_s1 = ref_forward(xyz1, xyz2_s1, None, points2_s1, params_s1)
    out_s1 = jax.block_until_ready(
        pointnet_fp_forward(xyz1, xyz2_s1, None, points2_s1, params_s1,
                            matmul_dtype=jnp.float32))
    err_s1 = float(jnp.max(jnp.abs(out_s1 - ref_s1)))
    assert jnp.allclose(out_s1, ref_s1, atol=5e-4, rtol=5e-4), err_s1

    print("KERNEL_OK")
</pallas_src>

<mosaic_0001>
module attributes {stable_mosaic.version = 11 : i64} {
  func.func @kernel(%arg0: i32, %arg1: i32, %arg2: memref<1x5x256xf32, #tpu.memory_space<vmem>>, %arg3: memref<1x32x5xf32, #tpu.memory_space<vmem>>, %arg4: memref<1x16x256xf32, #tpu.memory_space<vmem>>, %arg5: memref<1x32x32xf32, #tpu.memory_space<vmem>>, %arg6: memref<64x16xf32, #tpu.memory_space<vmem>>, %arg7: memref<64x32xf32, #tpu.memory_space<vmem>>, %arg8: memref<64x1xf32, #tpu.memory_space<vmem>>, %arg9: memref<32x64xf32, #tpu.memory_space<vmem>>, %arg10: memref<32x1xf32, #tpu.memory_space<vmem>>, %arg11: memref<1x32x256xf32, #tpu.memory_space<vmem>>) attributes {dimension_semantics = [#tpu.dimension_semantics<parallel>, #tpu.dimension_semantics<parallel>], iteration_bounds = array<i64: 2, 1>, scalar_prefetch = 0 : i64, scratch_operands = 0 : i64, tpu.core_type = #tpu.core_type<tc>, window_params = [{transform_indices = @transform_0, window_bounds = array<i64: 1, 5, 256>}, {transform_indices = @transform_1, window_bounds = array<i64: 1, 32, 5>}, {transform_indices = @transform_2, window_bounds = array<i64: 1, 16, 256>}, {transform_indices = @transform_3, window_bounds = array<i64: 1, 32, 32>}, {pipeline_mode = #tpu.pipeline_mode<synchronous>, transform_indices = @transform_4, window_bounds = array<i64: 64, 16>}, {pipeline_mode = #tpu.pipeline_mode<synchronous>, transform_indices = @transform_5, window_bounds = array<i64: 64, 32>}, {pipeline_mode = #tpu.pipeline_mode<synchronous>, transform_indices = @transform_6, window_bounds = array<i64: 64, 1>}, {pipeline_mode = #tpu.pipeline_mode<synchronous>, transform_indices = @transform_7, window_bounds = array<i64: 32, 64>}, {pipeline_mode = #tpu.pipeline_mode<synchronous>, transform_indices = @transform_8, window_bounds = array<i64: 32, 1>}, {transform_indices = @transform_9, window_bounds = array<i64: 1, 32, 256>}]} {
    %c0 = arith.constant 0 : index
    %c0_0 = arith.constant 0 : index
    %c0_1 = arith.constant 0 : index
    %0 = vector.load %arg5[%c0, %c0_0, %c0_1] : memref<1x32x32xf32, #tpu.memory_space<vmem>>, vector<1x32x32xf32>
    %1 = vector.shape_cast %0 : vector<1x32x32xf32> to vector<32x32xf32>
    %c0_2 = arith.constant 0 : index
    %c0_3 = arith.constant 0 : index
    %c0_4 = arith.constant 0 : index
    %2 = vector.load %arg3[%c0_2, %c0_3, %c0_4] : memref<1x32x5xf32, #tpu.memory_space<vmem>>, vector<1x32x5xf32>
    %3 = vector.shape_cast %2 : vector<1x32x5xf32> to vector<32x5xf32>
    %c0_5 = arith.constant 0 : index
    %c0_6 = arith.constant 0 : index
    %c0_7 = arith.constant 0 : index
    %4 = vector.load %arg2[%c0_5, %c0_6, %c0_7] : memref<1x5x256xf32, #tpu.memory_space<vmem>>, vector<1x5x256xf32>
    %5 = vector.shape_cast %4 : vector<1x5x256xf32> to vector<5x256xf32>
    %cst = arith.constant dense<0.000000e+00> : vector<32x256xf32>
    %6 = tpu.matmul %3, %5, %cst {dimension_numbers = #tpu.dot_dimension_numbers<[1], [0], [0], [1], [0, 0, 1, 1], [], []>} : vector<32x5xf32>, vector<5x256xf32>, vector<32x256xf32> -> vector<32x256xf32>
    %cst_8 = arith.constant 0.000000e+00 : f32
    %7 = vector.broadcast %cst_8 : f32 to vector<32x256xf32>
    %8 = arith.maximumf %6, %7 : vector<32x256xf32>
    %9 = tpu.iota {dimensions = array<i32: 0>} : vector<32x256xi32>
    %10 = tpu.bitcast %8 : vector<32x256xf32> -> vector<32x256xi32>
    %c-32_i32 = arith.constant -32 : i32
    %11 = vector.broadcast %c-32_i32 : i32 to vector<32x256xi32>
    %12 = arith.andi %10, %11 : vector<32x256xi32>
    %13 = arith.ori %12, %9 : vector<32x256xi32>
    %cst_9 = arith.constant dense<2147483647> : vector<256xi32>
    %14 = vector.multi_reduction <minsi>, %13, %cst_9 [0] : vector<32x256xi32> to vector<256xi32>
    %15 = vector.shape_cast %14 : vector<256xi32> to vector<1x256xi32>
    %16 = vector.broadcast %15 : vector<1x256xi32> to vector<32x256xi32>
    %17 = arith.cmpi eq, %13, %16 : vector<32x256xi32>
    %c2147483647_i32 = arith.constant 2147483647 : i32
    %18 = vector.broadcast %c2147483647_i32 : i32 to vector<32x256xi32>
    %19 = arith.select %17, %18, %13 : vector<32x256xi1>, vector<32x256xi32>
    %cst_10 = arith.constant dense<2147483647> : vector<256xi32>
    %20 = vector.multi_reduction <minsi>, %19, %cst_10 [0] : vector<32x256xi32> to vector<256xi32>
    %21 = vector.shape_cast %20 : vector<256xi32> to vector<1x256xi32>
    %22 = vector.broadcast %21 : vector<1x256xi32> to vector<32x256xi32>
    %23 = arith.cmpi eq, %19, %22 : vector<32x256xi32>
    %c2147483647_i32_11 = arith.constant 2147483647 : i32
    %24 = vector.broadcast %c2147483647_i32_11 : i32 to vector<32x256xi32>
    %25 = arith.select %23, %24, %19 : vector<32x256xi1>, vector<32x256xi32>
    %cst_12 = arith.constant dense<2147483647> : vector<256xi32>
    %26 = vector.multi_reduction <minsi>, %25, %cst_12 [0] : vector<32x256xi32> to vector<256xi32>
    %27 = vector.shape_cast %26 : vector<256xi32> to vector<1x256xi32>
    %28 = vector.broadcast %27 : vector<1x256xi32> to vector<32x256xi32>
    %29 = arith.cmpi eq, %25, %28 : vector<32x256xi32>
    %c-32_i32_13 = arith.constant -32 : i32
    %30 = vector.broadcast %c-32_i32_13 : i32 to vector<1x256xi32>
    %31 = arith.andi %15, %30 : vector<1x256xi32>
    %32 = tpu.bitcast %31 : vector<1x256xi32> -> vector<1x256xf32>
    %c-32_i32_14 = arith.constant -32 : i32
    %33 = vector.broadcast %c-32_i32_14 : i32 to vector<1x256xi32>
    %34 = arith.andi %21, %33 : vector<1x256xi32>
    %35 = tpu.bitcast %34 : vector<1x256xi32> -> vector<1x256xf32>
    %c-32_i32_15 = arith.constant -32 : i32
    %36 = vector.broadcast %c-32_i32_15 : i32 to vector<1x256xi32>
    %37 = arith.andi %27, %36 : vector<1x256xi32>
    %38 = tpu.bitcast %37 : vector<1x256xi32> -> vector<1x256xf32>
    %cst_16 = arith.constant 9.99999993E-9 : f32
    %39 = vector.broadcast %cst_16 : f32 to vector<1x256xf32>
    %40 = arith.addf %32, %39 : vector<1x256xf32>
    %cst_17 = arith.constant 1.000000e+00 : f32
    %41 = vector.broadcast %cst_17 : f32 to vector<1x256xf32>
    %42 = arith.divf %41, %40 : vector<1x256xf32>
    %cst_18 = arith.constant 9.99999993E-9 : f32
    %43 = vector.broadcast %cst_18 : f32 to vector<1x256xf32>
    %44 = arith.addf %35, %43 : vector<1x256xf32>
    %cst_19 = arith.constant 1.000000e+00 : f32
    %45 = vector.broadcast %cst_19 : f32 to vector<1x256xf32>
    %46 = arith.divf %45, %44 : vector<1x256xf32>
    %cst_20 = arith.constant 9.99999993E-9 : f32
    %47 = vector.broadcast %cst_20 : f32 to vector<1x256xf32>
    %48 = arith.addf %38, %47 : vector<1x256xf32>
    %cst_21 = arith.constant 1.000000e+00 : f32
    %49 = vector.broadcast %cst_21 : f32 to vector<1x256xf32>
    %50 = arith.divf %49, %48 : vector<1x256xf32>
    %51 = arith.addf %42, %46 : vector<1x256xf32>
    %52 = arith.addf %51, %50 : vector<1x256xf32>
    %cst_22 = arith.constant 1.000000e+00 : f32
    %53 = vector.broadcast %cst_22 : f32 to vector<1x256xf32>
    %54 = arith.divf %53, %52 : vector<1x256xf32>
    %55 = arith.mulf %42, %54 : vector<1x256xf32>
    %56 = arith.mulf %46, %54 : vector<1x256xf32>
    %57 = arith.mulf %50, %54 : vector<1x256xf32>
    %cst_23 = arith.constant 0.000000e+00 : f32
    %58 = vector.shape_cast %55 : vector<1x256xf32> to vector<1x256xf32>
    %59 = vector.broadcast %58 : vector<1x256xf32> to vector<32x256xf32>
    %60 = vector.broadcast %cst_23 : f32 to vector<32x256xf32>
    %61 = arith.select %17, %59, %60 : vector<32x256xi1>, vector<32x256xf32>
    %cst_24 = arith.constant 0.000000e+00 : f32
    %62 = vector.shape_cast %56 : vector<1x256xf32> to vector<1x256xf32>
    %63 = vector.broadcast %62 : vector<1x256xf32> to vector<32x256xf32>
    %64 = vector.broadcast %cst_24 : f32 to vector<32x256xf32>
    %65 = arith.select %23, %63, %64 : vector<32x256xi1>, vector<32x256xf32>
    %66 = arith.addf %61, %65 : vector<32x256xf32>
    %cst_25 = arith.constant 0.000000e+00 : f32
    %67 = vector.shape_cast %57 : vector<1x256xf32> to vector<1x256xf32>
    %68 = vector.broadcast %67 : vector<1x256xf32> to vector<32x256xf32>
    %69 = vector.broadcast %cst_25 : f32 to vector<32x256xf32>
    %70 = arith.select %29, %68, %69 : vector<32x256xi1>, vector<32x256xf32>
    %71 = arith.addf %66, %70 : vector<32x256xf32>
    %cst_26 = arith.constant dense<0.000000e+00> : vector<32x256xf32>
    %72 = tpu.matmul %1, %71, %cst_26 {dimension_numbers = #tpu.dot_dimension_numbers<[1], [0], [0], [1], [0, 0, 1, 1], [], []>} : vector<32x32xf32>, vector<32x256xf32>, vector<32x256xf32> -> vector<32x256xf32>
    %c0_27 = arith.constant 0 : index
    %c0_28 = arith.constant 0 : index
    %73 = vector.load %arg6[%c0_27, %c0_28] : memref<64x16xf32, #tpu.memory_space<vmem>>, vector<64x16xf32>
    %c0_29 = arith.constant 0 : index
    %c0_30 = arith.constant 0 : index
    %c0_31 = arith.constant 0 : index
    %74 = vector.load %arg4[%c0_29, %c0_30, %c0_31] : memref<1x16x256xf32, #tpu.memory_space<vmem>>, vector<1x16x256xf32>
    %75 = vector.shape_cast %74 : vector<1x16x256xf32> to vector<16x256xf32>
    %cst_32 = arith.constant dense<0.000000e+00> : vector<64x256xf32>
    %76 = tpu.matmul %73, %75, %cst_32 {dimension_numbers = #tpu.dot_dimension_numbers<[1], [0], [0], [1], [0, 0, 1, 1], [], []>} : vector<64x16xf32>, vector<16x256xf32>, vector<64x256xf32> -> vector<64x256xf32>
    %c0_33 = arith.constant 0 : index
    %c0_34 = arith.constant 0 : index
    %77 = vector.load %arg7[%c0_33, %c0_34] : memref<64x32xf32, #tpu.memory_space<vmem>>, vector<64x32xf32>
    %cst_35 = arith.constant dense<0.000000e+00> : vector<64x256xf32>
    %78 = tpu.matmul %77, %72, %cst_35 {dimension_numbers = #tpu.dot_dimension_numbers<[1], [0], [0], [1], [0, 0, 1, 1], [], []>} : vector<64x32xf32>, vector<32x256xf32>, vector<64x256xf32> -> vector<64x256xf32>
    %79 = arith.addf %76, %78 : vector<64x256xf32>
    %c0_36 = arith.constant 0 : index
    %c0_37 = arith.constant 0 : index
    %80 = vector.load %arg8[%c0_36, %c0_37] : memref<64x1xf32, #tpu.memory_space<vmem>>, vector<64x1xf32>
    %81 = vector.broadcast %80 : vector<64x1xf32> to vector<64x256xf32>
    %82 = arith.addf %79, %81 : vector<64x256xf32>
    %cst_38 = arith.constant 0.000000e+00 : f32
    %83 = vector.broadcast %cst_38 : f32 to vector<64x256xf32>
    %84 = arith.maximumf %82, %83 : vector<64x256xf32>
    %c0_39 = arith.constant 0 : index
    %c0_40 = arith.constant 0 : index
    %85 = vector.load %arg9[%c0_39, %c0_40] : memref<32x64xf32, #tpu.memory_space<vmem>>, vector<32x64xf32>
    %cst_41 = arith.constant dense<0.000000e+00> : vector<32x256xf32>
    %86 = tpu.matmul %85, %84, %cst_41 {dimension_numbers = #tpu.dot_dimension_numbers<[1], [0], [0], [1], [0, 0, 1, 1], [], []>} : vector<32x64xf32>, vector<64x256xf32>, vector<32x256xf32> -> vector<32x256xf32>
    %c0_42 = arith.constant 0 : index
    %c0_43 = arith.constant 0 : index
    %87 = vector.load %arg10[%c0_42, %c0_43] : memref<32x1xf32, #tpu.memory_space<vmem>>, vector<32x1xf32>
    %88 = vector.broadcast %87 : vector<32x1xf32> to vector<32x256xf32>
    %89 = arith.addf %86, %88 : vector<32x256xf32>
    %cst_44 = arith.constant 0.000000e+00 : f32
    %90 = vector.broadcast %cst_44 : f32 to vector<32x256xf32>
    %91 = arith.maximumf %89, %90 : vector<32x256xf32>
    %c0_45 = arith.constant 0 : index
    %c0_46 = arith.constant 0 : index
    %c0_47 = arith.constant 0 : index
    %92 = vector.load %arg11[%c0_45, %c0_46, %c0_47] : memref<1x32x256xf32, #tpu.memory_space<vmem>>, vector<1x32x256xf32>
    %93 = vector.shape_cast %92 : vector<1x32x256xf32> to vector<32x256xf32>
    %94 = vector.shape_cast %91 : vector<32x256xf32> to vector<1x32x256xf32>
    tpu.vector_store %arg11[%c0_45, %c0_46, %c0_47], %94 {strides = array<i32>} : memref<1x32x256xf32, #tpu.memory_space<vmem>>, vector<1x32x256xf32>,
    return
  }
  func.func @transform_0(%arg0: i32, %arg1: i32) -> (i32, i32, i32) {
    %c0_i32 = arith.constant 0 : i32
    %c0_i32_0 = arith.constant 0 : i32
    return %arg0, %c0_i32, %arg1 : i32, i32, i32
  }
  func.func @transform_1(%arg0: i32, %arg1: i32) -> (i32, i32, i32) {
    %c0_i32 = arith.constant 0 : i32
    %c0_i32_0 = arith.constant 0 : i32
    %c0_i32_1 = arith.constant 0 : i32
    return %arg0, %c0_i32, %c0_i32_0 : i32, i32, i32
  }
  func.func @transform_2(%arg0: i32, %arg1: i32) -> (i32, i32, i32) {
    %c0_i32 = arith.constant 0 : i32
    %c0_i32_0 = arith.constant 0 : i32
    return %arg0, %c0_i32, %arg1 : i32, i32, i32
  }
  func.func @transform_3(%arg0: i32, %arg1: i32) -> (i32, i32, i32) {
    %c0_i32 = arith.constant 0 : i32
    %c0_i32_0 = arith.constant 0 : i32
    %c0_i32_1 = arith.constant 0 : i32
    return %arg0, %c0_i32, %c0_i32_0 : i32, i32, i32
  }
  func.func @transform_4(%arg0: i32, %arg1: i32) -> (i32, i32) {
    %c0_i32 = arith.constant 0 : i32
    %c0_i32_0 = arith.constant 0 : i32
    %c0_i32_1 = arith.constant 0 : i32
    return %c0_i32, %c0_i32_0 : i32, i32
  }
  func.func @transform_5(%arg0: i32, %arg1: i32) -> (i32, i32) {
    %c0_i32 = arith.constant 0 : i32
    %c0_i32_0 = arith.constant 0 : i32
    %c0_i32_1 = arith.constant 0 : i32
    return %c0_i32, %c0_i32_0 : i32, i32
  }
  func.func @transform_6(%arg0: i32, %arg1: i32) -> (i32, i32) {
    %c0_i32 = arith.constant 0 : i32
    %c0_i32_0 = arith.constant 0 : i32
    %c0_i32_1 = arith.constant 0 : i32
    return %c0_i32, %c0_i32_0 : i32, i32
  }
  func.func @transform_7(%arg0: i32, %arg1: i32) -> (i32, i32) {
    %c0_i32 = arith.constant 0 : i32
    %c0_i32_0 = arith.constant 0 : i32
    %c0_i32_1 = arith.constant 0 : i32
    return %c0_i32, %c0_i32_0 : i32, i32
  }
  func.func @transform_8(%arg0: i32, %arg1: i32) -> (i32, i32) {
    %c0_i32 = arith.constant 0 : i32
    %c0_i32_0 = arith.constant 0 : i32
    %c0_i32_1 = arith.constant 0 : i32
    return %c0_i32, %c0_i32_0 : i32, i32
  }
  func.func @transform_9(%arg0: i32, %arg1: i32) -> (i32, i32, i32) {
    %c0_i32 = arith.constant 0 : i32
    %c0_i32_0 = arith.constant 0 : i32
    return %arg0, %c0_i32, %arg1 : i32, i32, i32
  }
}

</mosaic_0001>

<llo_original>
// kernel: tpu_custom_call.1
$region0: #{tpu_custom_call.1}
  #allocation0 [shape = 'u32[]', space=smem, size = 0x4, offset = 0x4, fixed_abs, tag = 'smem constant byte address 0x4 - core index']
  #allocation1 [shape = 'u32[144,128]{1,0:T(1,128)}', space=vmem, size = 0x12000, scoped, tag = 'internal scratch']
  %s0 = inlined_call_operand.vmem [shape: f32[2,5,256], index: 0, kind: input, shape index: {}]
  %s1 = inlined_call_operand.vmem [shape: f32[2,32,5], index: 1, kind: input, shape index: {}]
  %s2 = inlined_call_operand.vmem [shape: f32[2,16,256], index: 2, kind: input, shape index: {}]
  %s3 = inlined_call_operand.vmem [shape: f32[2,32,32], index: 3, kind: input, shape index: {}]
  %s4 = inlined_call_operand.vmem [shape: f32[64,16], index: 4, kind: input, shape index: {}]
  %s5 = inlined_call_operand.vmem [shape: f32[64,32], index: 5, kind: input, shape index: {}]
  %s6 = inlined_call_operand.vmem [shape: f32[64,1], index: 6, kind: input, shape index: {}]
  %s7 = inlined_call_operand.vmem [shape: f32[32,64], index: 7, kind: input, shape index: {}]
  %s8 = inlined_call_operand.vmem [shape: f32[32,1], index: 8, kind: input, shape index: {}]
  %s9 = inlined_call_operand.hbm [shape: f32[2,32,256], index: 9, kind: output, shape index: {}]
  %s10 = sld [smem:[#allocation0]]
  $region69: #{tpu_custom_call.1} parent=0
    _
  %s12 = ssub.s32 1, %s10
  %s13 = scalar_select 0, %s12, %s10
  $region1: #{tpu_custom_call.1} parent=0
    #allocation2 [shape = 'u8[65536]{0}', space=vmem, size = 0x10000, scoped, tag = 'output window, operand 0']
    #allocation3 [shape = 's32[2]{0}', space=sflag, size = 0x8, scoped, tag = 'scoped memory for tpu_custom_call.1']
    %14 = vsyncpa [#allocation3], 0
    %s15 = scalar_lea.sflag [#allocation3], 1
    %16 = vsyncpa %s15, 0
    loop: start=0, step=1, limit=4
    $region2: #{tpu_custom_call.1} parent=1 // loop_pre_header
      _
    $region3: #{tpu_custom_call.1} parent=1 // loop_header
      %s18 = sphi 0, %s22
      %p19 = scmp.ge.s32.totalorder %s18, 4
      %s25 = sphi 0, %s37
      %s26 = sphi 0, %s33
      %s27 = sphi 0, %s25
      %s28 = sphi 0, %s26
      %s29 = sphi 0, %s27
      %s30 = sphi 0, %s28
      %s42 = sphi 0, %s44
      %s45 = sphi 0, %s42
      %s46 = sphi 0, %s45
      %s62 = sphi 0, %s46
      %s68 = sphi 0, %s70
      %s71 = sphi 0, %s68
      %s72 = sphi 0, %s71
      %s88 = sphi 0, %s72
      %s96 = sphi 0, %s98
      %s99 = sphi 0, %s96
      %s100 = sphi 0, %s99
      %s116 = sphi 0, %s100
      %s122 = sphi 0, %s124
      %s125 = sphi 0, %s122
      %s126 = sphi 0, %s125
      %s142 = sphi 0, %s126
      %s146 = sphi 0, %s146
      %s148 = sphi 0, %s146
      %s149 = sphi 0, %s148
      %s163 = sphi 0, %s149
      %s167 = sphi 0, %s167
      %s169 = sphi 0, %s167
      %s170 = sphi 0, %s169
      %s184 = sphi 0, %s170
      %s188 = sphi 0, %s188
      %s190 = sphi 0, %s188
      %s191 = sphi 0, %s190
      %s205 = sphi 0, %s191
      %s209 = sphi 0, %s209
      %s211 = sphi 0, %s209
      %s212 = sphi 0, %s211
      %s226 = sphi 0, %s212
      %s230 = sphi 0, %s230
      %s232 = sphi 0, %s230
      %s233 = sphi 0, %s232
      %s247 = sphi 0, %s233
      %s255 = sphi 0, %s257
      %s258 = sphi 0, %s255
      %s259 = sphi 0, %s258
      %s275 = sphi 0, %s259
    $region4: #{tpu_custom_call.1} parent=1 // loop_header_branch
      %21 = sbr.rel (%p19) target = $region8
    $region5: #{tpu_custom_call.1} parent=1 // loop_body
      %s23 = ssub.s32 %s18, 1
      %s24 = ssub.s32 %s18, 2
      %s31 = sadd.s32 1, %s26
      %p32 = scmp.ge.s32.totalorder %s31, 1
      %s33 = scalar_select %p32, 0, %s31
      %s34 = sadd.s32 1, %s25
      %s35 = scalar_select %p32, %s34, %s25
      %p36 = scmp.ge.s32.totalorder %s35, 2
      %s37 = scalar_select %p36, 0, %s35
      %s38 = ssub.s32 %s25, %s37
      %s39 = ssub.s32 %s26, %s33
      %s40 = sor.u32 %s38, %s39
      %p41 = scmp.eq.s32.totalorder %s40, 0
      %s43 = sadd.s32 %s42, 1
      %s44 = scalar_select %p41, %s42, %s43
      %p47 = pneg %p41
      %p48 = scmp.eq.s32.totalorder %s18, 1
      %p49 = por %p47, %p48
      %p50 = scmp.ne.s32.totalorder %s42, %s45
      %p51 = scmp.eq.s32.totalorder %s18, 0
      %p52 = por %p50, %p51
      %p53 = scmp.ne.s32.totalorder %s42, %s45
      %p54 = scmp.eq.s32.totalorder %s23, 1
      %p55 = por %p53, %p54
      %p56 = scmp.ne.s32.totalorder %s45, %s46
      %p57 = scmp.eq.s32.totalorder %s23, 0
      %p58 = por %p56, %p57
      %p59 = scmp.ne.s32.totalorder %s45, %s46
      %p60 = scmp.eq.s32.totalorder %s24, 1
      %p61 = por %p59, %p60
      %p63 = scmp.ne.s32.totalorder %s46, %s62
      %p64 = scmp.eq.s32.totalorder %s24, 0
      %p65 = por %p63, %p64
      %s66 = ssub.s32 %s25, %s37
      %p67 = scmp.eq.s32.totalorder %s66, 0
      %s69 = sadd.s32 %s68, 1
      %s70 = scalar_select %p67, %s68, %s69
      %p73 = pneg %p67
      %p74 = scmp.eq.s32.totalorder %s18, 1
      %p75 = por %p73, %p74
      %p76 = scmp.ne.s32.totalorder %s68, %s71
      %p77 = scmp.eq.s32.totalorder %s18, 0
      %p78 = por %p76, %p77
      %p79 = scmp.ne.s32.totalorder %s68, %s71
      %p80 = scmp.eq.s32.totalorder %s23, 1
      %p81 = por %p79, %p80
      %p82 = scmp.ne.s32.totalorder %s71, %s72
      %p83 = scmp.eq.s32.totalorder %s23, 0
      %p84 = por %p82, %p83
      %p85 = scmp.ne.s32.totalorder %s71, %s72
      %p86 = scmp.eq.s32.totalorder %s24, 1
      %p87 = por %p85, %p86
      %p89 = scmp.ne.s32.totalorder %s72, %s88
      %p90 = scmp.eq.s32.totalorder %s24, 0
      %p91 = por %p89, %p90
      %s92 = ssub.s32 %s25, %s37
      %s93 = ssub.s32 %s26, %s33
      %s94 = sor.u32 %s92, %s93
      %p95 = scmp.eq.s32.totalorder %s94, 0
      %s97 = sadd.s32 %s96, 1
      %s98 = scalar_select %p95, %s96, %s97
      %p101 = pneg %p95
      %p102 = scmp.eq.s32.totalorder %s18, 1
      %p103 = por %p101, %p102
      %p104 = scmp.ne.s32.totalorder %s96, %s99
      %p105 = scmp.eq.s32.totalorder %s18, 0
      %p106 = por %p104, %p105
      %p107 = scmp.ne.s32.totalorder %s96, %s99
      %p108 = scmp.eq.s32.totalorder %s23, 1
      %p109 = por %p107, %p108
      %p110 = scmp.ne.s32.totalorder %s99, %s100
      %p111 = scmp.eq.s32.totalorder %s23, 0
      %p112 = por %p110, %p111
      %p113 = scmp.ne.s32.totalorder %s99, %s100
      %p114 = scmp.eq.s32.totalorder %s24, 1
      %p115 = por %p113, %p114
      %p117 = scmp.ne.s32.totalorder %s100, %s116
      %p118 = scmp.eq.s32.totalorder %s24, 0
      %p119 = por %p117, %p118
      %s120 = ssub.s32 %s25, %s37
      %p121 = scmp.eq.s32.totalorder %s120, 0
      %s123 = sadd.s32 %s122, 1
      %s124 = scalar_select %p121, %s122, %s123
      %p127 = pneg %p121
      %p128 = scmp.eq.s32.totalorder %s18, 1
      %p129 = por %p127, %p128
      %p130 = scmp.ne.s32.totalorder %s122, %s125
      %p131 = scmp.eq.s32.totalorder %s18, 0
      %p132 = por %p130, %p131
      %p133 = scmp.ne.s32.totalorder %s122, %s125
      %p134 = scmp.eq.s32.totalorder %s23, 1
      %p135 = por %p133, %p134
      %p136 = scmp.ne.s32.totalorder %s125, %s126
      %p137 = scmp.eq.s32.totalorder %s23, 0
      %p138 = por %p136, %p137
      %p139 = scmp.ne.s32.totalorder %s125, %s126
      %p140 = scmp.eq.s32.totalorder %s24, 1
      %p141 = por %p139, %p140
      %p143 = scmp.ne.s32.totalorder %s126, %s142
      %p144 = scmp.eq.s32.totalorder %s24, 0
      %p145 = por %p143, %p144
      %s147 = sadd.s32 %s146, 1
      %p150 = scmp.eq.s32.totalorder %s18, 1
      %p151 = scmp.ne.s32.totalorder %s146, %s148
      %p152 = scmp.eq.s32.totalorder %s18, 0
      %p153 = por %p151, %p152
      %p154 = scmp.ne.s32.totalorder %s146, %s148
      %p155 = scmp.eq.s32.totalorder %s23, 1
      %p156 = por %p154, %p155
      %p157 = scmp.ne.s32.totalorder %s148, %s149
      %p158 = scmp.eq.s32.totalorder %s23, 0
      %p159 = por %p157, %p158
      %p160 = scmp.ne.s32.totalorder %s148, %s149
      %p161 = scmp.eq.s32.totalorder %s24, 1
      %p162 = por %p160, %p161
      %p164 = scmp.ne.s32.totalorder %s149, %s163
      %p165 = scmp.eq.s32.totalorder %s24, 0
      %p166 = por %p164, %p165
      %s168 = sadd.s32 %s167, 1
      %p171 = scmp.eq.s32.totalorder %s18, 1
      %p172 = scmp.ne.s32.totalorder %s167, %s169
      %p173 = scmp.eq.s32.totalorder %s18, 0
      %p174 = por %p172, %p173
      %p175 = scmp.ne.s32.totalorder %s167, %s169
      %p176 = scmp.eq.s32.totalorder %s23, 1
      %p177 = por %p175, %p176
      %p178 = scmp.ne.s32.totalorder %s169, %s170
      %p179 = scmp.eq.s32.totalorder %s23, 0
      %p180 = por %p178, %p179
      %p181 = scmp.ne.s32.totalorder %s169, %s170
      %p182 = scmp.eq.s32.totalorder %s24, 1
      %p183 = por %p181, %p182
      %p185 = scmp.ne.s32.totalorder %s170, %s184
      %p186 = scmp.eq.s32.totalorder %s24, 0
      %p187 = por %p185, %p186
      %s189 = sadd.s32 %s188, 1
      %p192 = scmp.eq.s32.totalorder %s18, 1
      %p193 = scmp.ne.s32.totalorder %s188, %s190
      %p194 = scmp.eq.s32.totalorder %s18, 0
      %p195 = por %p193, %p194
      %p196 = scmp.ne.s32.totalorder %s188, %s190
      %p197 = scmp.eq.s32.totalorder %s23, 1
      %p198 = por %p196, %p197
      %p199 = scmp.ne.s32.totalorder %s190, %s191
      %p200 = scmp.eq.s32.totalorder %s23, 0
      %p201 = por %p199, %p200
      %p202 = scmp.ne.s32.totalorder %s190, %s191
      %p203 = scmp.eq.s32.totalorder %s24, 1
      %p204 = por %p202, %p203
      %p206 = scmp.ne.s32.totalorder %s191, %s205
      %p207 = scmp.eq.s32.totalorder %s24, 0
      %p208 = por %p206, %p207
      %s210 = sadd.s32 %s209, 1
      %p213 = scmp.eq.s32.totalorder %s18, 1
      %p214 = scmp.ne.s32.totalorder %s209, %s211
      %p215 = scmp.eq.s32.totalorder %s18, 0
      %p216 = por %p214, %p215
      %p217 = scmp.ne.s32.totalorder %s209, %s211
      %p218 = scmp.eq.s32.totalorder %s23, 1
      %p219 = por %p217, %p218
      %p220 = scmp.ne.s32.totalorder %s211, %s212
      %p221 = scmp.eq.s32.totalorder %s23, 0
      %p222 = por %p220, %p221
      %p223 = scmp.ne.s32.totalorder %s211, %s212
      %p224 = scmp.eq.s32.totalorder %s24, 1
      %p225 = por %p223, %p224
      %p227 = scmp.ne.s32.totalorder %s212, %s226
      %p228 = scmp.eq.s32.totalorder %s24, 0
      %p229 = por %p227, %p228
      %s231 = sadd.s32 %s230, 1
      %p234 = scmp.eq.s32.totalorder %s18, 1
      %p235 = scmp.ne.s32.totalorder %s230, %s232
      %p236 = scmp.eq.s32.totalorder %s18, 0
      %p237 = por %p235, %p236
      %p238 = scmp.ne.s32.totalorder %s230, %s232
      %p239 = scmp.eq.s32.totalorder %s23, 1
      %p240 = por %p238, %p239
      %p241 = scmp.ne.s32.totalorder %s232, %s233
      %p242 = scmp.eq.s32.totalorder %s23, 0
      %p243 = por %p241, %p242
      %p244 = scmp.ne.s32.totalorder %s232, %s233
      %p245 = scmp.eq.s32.totalorder %s24, 1
      %p246 = por %p244, %p245
      %p248 = scmp.ne.s32.totalorder %s233, %s247
      %p249 = scmp.eq.s32.totalorder %s24, 0
      %p250 = por %p248, %p249
      %s251 = ssub.s32 %s25, %s37
      %s252 = ssub.s32 %s26, %s33
      %s253 = sor.u32 %s251, %s252
      %p254 = scmp.eq.s32.totalorder %s253, 0
      %s256 = sadd.s32 %s255, 1
      %s257 = scalar_select %p254, %s255, %s256
      %p260 = pneg %p254
      %p261 = scmp.eq.s32.totalorder %s18, 1
      %p262 = por %p260, %p261
      %p263 = scmp.ne.s32.totalorder %s255, %s258
      %p264 = scmp.eq.s32.totalorder %s18, 0
      %p265 = por %p263, %p264
      %p266 = scmp.ne.s32.totalorder %s255, %s258
      %p267 = scmp.eq.s32.totalorder %s23, 1
      %p268 = por %p266, %p267
      %p269 = scmp.ne.s32.totalorder %s258, %s259
      %p270 = scmp.eq.s32.totalorder %s23, 0
      %p271 = por %p269, %p270
      %p272 = scmp.ne.s32.totalorder %s258, %s259
      %p273 = scmp.eq.s32.totalorder %s24, 1
      %p274 = por %p272, %p273
      %p276 = scmp.ne.s32.totalorder %s259, %s275
      %p277 = scmp.eq.s32.totalorder %s24, 0
      %p278 = por %p276, %p277
      %p279 = scmp.le.s32.totalorder 1, %s18
      %p280 = scmp.lt.s32.totalorder %s18, 3
      %p281 = pnand %p279, %p280
      %p282 = pneg %p281
      // Predicated region
      $region9: #{tpu_custom_call.1} parent=5 // pred_check
        _
      $region10: #{tpu_custom_call.1} parent=5 // pred_check_branch
        %284 = sbr.rel (%p281) target = $region12
      $region11: #{tpu_custom_call.1} parent=5 // pred_region
        %s285 = ssub.s32 %s18, 1
        // Predicated region
        $region13: #{tpu_custom_call.1} parent=11 // pred_check
          %p286 = pneg %p159
        $region14: #{tpu_custom_call.1} parent=11 // pred_check_branch
          %288 = sbr.rel (%p286) target = $region16
        $region15: #{tpu_custom_call.1} parent=11 // pred_region
          _
        $region16: #{tpu_custom_call.1} parent=11 // pred_fallthru
          _
        // Predicated region
        $region17: #{tpu_custom_call.1} parent=11 // pred_check
          %p289 = pneg %p180
        $region18: #{tpu_custom_call.1} parent=11 // pred_check_branch
          %291 = sbr.rel (%p289) target = $region20
        $region19: #{tpu_custom_call.1} parent=11 // pred_region
          _
        $region20: #{tpu_custom_call.1} parent=11 // pred_fallthru
          _
        // Predicated region
        $region21: #{tpu_custom_call.1} parent=11 // pred_check
          %p292 = pneg %p201
        $region22: #{tpu_custom_call.1} parent=11 // pred_check_branch
          %294 = sbr.rel (%p292) target = $region24
        $region23: #{tpu_custom_call.1} parent=11 // pred_region
          _
        $region24: #{tpu_custom_call.1} parent=11 // pred_fallthru
          _
        // Predicated region
        $region25: #{tpu_custom_call.1} parent=11 // pred_check
          %p295 = pneg %p222
        $region26: #{tpu_custom_call.1} parent=11 // pred_check_branch
          %297 = sbr.rel (%p295) target = $region28
        $region27: #{tpu_custom_call.1} parent=11 // pred_region
          _
        $region28: #{tpu_custom_call.1} parent=11 // pred_fallthru
          _
        // Predicated region
        $region29: #{tpu_custom_call.1} parent=11 // pred_check
          %p298 = pneg %p243
        $region30: #{tpu_custom_call.1} parent=11 // pred_check_branch
          %300 = sbr.rel (%p298) target = $region32
        $region31: #{tpu_custom_call.1} parent=11 // pred_region
          _
        $region32: #{tpu_custom_call.1} parent=11 // pred_fallthru
          _
      $region12: #{tpu_custom_call.1} parent=5 // pred_fallthru
        _
      %p301 = scmp.lt.s32.totalorder %s18, 2
      // Predicated region
      $region33: #{tpu_custom_call.1} parent=5 // pred_check
        %p302 = pneg %p301
      $region34: #{tpu_custom_call.1} parent=5 // pred_check_branch
        %304 = sbr.rel (%p302) target = $region36
      $region35: #{tpu_custom_call.1} parent=5 // pred_region
        // Predicated region
        $region37: #{tpu_custom_call.1} parent=35 // pred_check
          %p305 = pneg %p52
        $region38: #{tpu_custom_call.1} parent=35 // pred_check_branch
          %307 = sbr.rel (%p305) target = $region40
        $region39: #{tpu_custom_call.1} parent=35 // pred_region
          %s308 = smul.u32 2, %s26
          %p309 = scmp.lt.s32.totalorder %s25, 1
          %s310 = scalar_select %p309, %s25, 1
          %p311 = scmp.lt.s32.totalorder %s308, 1
          %s312 = scalar_select %p311, %s308, 1
          %s313 = smul.addr %s310, 2
          %s314 = sadd.s32 %s312, %s313
          %s315 = smul.addr %s314, 8
          %s316 = scalar_lea.vmem %s0, %s315
          %s317 = smul.u32 2, %s26
        $region40: #{tpu_custom_call.1} parent=35 // pred_fallthru
          _
        // Predicated region
        $region41: #{tpu_custom_call.1} parent=35 // pred_check
          %p318 = pneg %p78
        $region42: #{tpu_custom_call.1} parent=35 // pred_check_branch
          %320 = sbr.rel (%p318) target = $region44
        $region43: #{tpu_custom_call.1} parent=35 // pred_region
          %p321 = scmp.lt.s32.totalorder %s25, 1
          %s322 = scalar_select %p321, %s25, 1
          %s323 = smul.addr %s322, 4
          %s324 = smul.addr %s323, 8
          %s325 = scalar_lea.vmem %s1, %s324
        $region44: #{tpu_custom_call.1} parent=35 // pred_fallthru
          _
        // Predicated region
        $region45: #{tpu_custom_call.1} parent=35 // pred_check
          %p326 = pneg %p106
        $region46: #{tpu_custom_call.1} parent=35 // pred_check_branch
          %328 = sbr.rel (%p326) target = $region48
        $region47: #{tpu_custom_call.1} parent=35 // pred_region
          %s329 = smul.u32 2, %s26
          %p330 = scmp.lt.s32.totalorder %s25, 1
          %s331 = scalar_select %p330, %s25, 1
          %p332 = scmp.lt.s32.totalorder %s329, 1
          %s333 = scalar_select %p332, %s329, 1
          %s334 = smul.addr %s331, 4
          %s335 = sadd.s32 %s333, %s334
          %s336 = smul.addr %s335, 8
          %s337 = scalar_lea.vmem %s2, %s336
          %s338 = smul.u32 2, %s26
        $region48: #{tpu_custom_call.1} parent=35 // pred_fallthru
          _
        // Predicated region
        $region49: #{tpu_custom_call.1} parent=35 // pred_check
          %p339 = pneg %p132
        $region50: #{tpu_custom_call.1} parent=35 // pred_check_branch
          %341 = sbr.rel (%p339) target = $region52
        $region51: #{tpu_custom_call.1} parent=35 // pred_region
          %p342 = scmp.lt.s32.totalorder %s25, 1
          %s343 = scalar_select %p342, %s25, 1
          %s344 = smul.addr %s343, 4
          %s345 = smul.addr %s344, 8
          %s346 = scalar_lea.vmem %s3, %s345
        $region52: #{tpu_custom_call.1} parent=35 // pred_fallthru
          _
      $region36: #{tpu_custom_call.1} parent=5 // pred_fallthru
        _
      %p347 = scmp.le.s32.totalorder 1, %s18
      %p348 = scmp.lt.s32.totalorder %s18, 3
      %p349 = pnand %p347, %p348
      %p350 = pneg %p349
      // Predicated region
      $region53: #{tpu_custom_call.1} parent=5 // pred_check
        _
      $region54: #{tpu_custom_call.1} parent=5 // pred_check_branch
        %352 = sbr.rel (%p349) target = $region56
      $region55: #{tpu_custom_call.1} parent=5 // pred_region
        %s353 = ssub.s32 %s18, 1
        %s354 = smul.u32 2, %s28
        %p355 = scmp.lt.s32.totalorder %s27, 1
        %s356 = scalar_select %p355, %s27, 1
        %p357 = scmp.lt.s32.totalorder %s354, 1
        %s358 = scalar_select %p357, %s354, 1
        %s359 = smul.addr %s356, 2
        %s360 = sadd.s32 %s358, %s359
        %s361 = smul.addr %s360, 8
        %s362 = scalar_lea.vmem %s0, %s361
        %p363 = pneg %p58
        %p364 = pneg %p55
        %p365 = scmp.lt.s32.totalorder %s27, 1
        %s366 = scalar_select %p365, %s27, 1
        %s367 = smul.addr %s366, 4
        %s368 = smul.addr %s367, 8
        %s369 = scalar_lea.vmem %s1, %s368
        %p370 = pneg %p84
        %p371 = pneg %p81
        %s372 = smul.u32 2, %s28
        %p373 = scmp.lt.s32.totalorder %s27, 1
        %s374 = scalar_select %p373, %s27, 1
        %p375 = scmp.lt.s32.totalorder %s372, 1
        %s376 = scalar_select %p375, %s372, 1
        %s377 = smul.addr %s374, 4
        %s378 = sadd.s32 %s376, %s377
        %s379 = smul.addr %s378, 8
        %s380 = scalar_lea.vmem %s2, %s379
        %p381 = pneg %p112
        %p382 = pneg %p109
        %p383 = scmp.lt.s32.totalorder %s27, 1
        %s384 = scalar_select %p383, %s27, 1
        %s385 = smul.addr %s384, 4
        %s386 = smul.addr %s385, 8
        %s387 = scalar_lea.vmem %s3, %s386
        %p388 = pneg %p138
        %p389 = pneg %p135
        %p390 = pneg %p159
        %p391 = pneg %p156
        %p392 = pneg %p180
        %p393 = pneg %p177
        %p394 = pneg %p201
        %p395 = pneg %p198
        %p396 = pneg %p222
        %p397 = pneg %p219
        %p398 = pneg %p243
        %p399 = pneg %p240
        %p400 = pneg %p271
        %p401 = pneg %p268
        %s402 = sand.u32 %s258, 1
        %s403 = scalar_lea.sflag [#allocation3], %s402
        %s404 = sand.u32 %s258, 1
        %s405 = smul.addr %s404, 64
        %s406 = scalar_lea.vmem [#allocation2], %s405
        %s407 = smul.u32 2, %s28
        %p408 = scmp.lt.s32.totalorder %s27, 1
        %s409 = scalar_select %p408, %s27, 1
        %p410 = scmp.lt.s32.totalorder %s407, 1
        %s411 = scalar_select %p410, %s407, 1
        %s412 = smul.addr %s409, 2
        %s413 = sadd.s32 %s411, %s412
        %s414 = smul.addr %s413, 8
        %s415 = scalar_lea.vmem %s0, %s414
        %s416 = smul.u32 2, %s28
        %p417 = scmp.lt.s32.totalorder %s27, 1
        %s418 = scalar_select %p417, %s27, 1
        %s419 = smul.addr %s418, 4
        %s420 = smul.addr %s419, 8
        %s421 = scalar_lea.vmem %s1, %s420
        %s422 = smul.u32 2, %s28
        %p423 = scmp.lt.s32.totalorder %s27, 1
        %s424 = scalar_select %p423, %s27, 1
        %p425 = scmp.lt.s32.totalorder %s422, 1
        %s426 = scalar_select %p425, %s422, 1
        %s427 = smul.addr %s424, 4
        %s428 = sadd.s32 %s426, %s427
        %s429 = smul.addr %s428, 8
        %s430 = scalar_lea.vmem %s2, %s429
        %s431 = smul.u32 2, %s28
        %p432 = scmp.lt.s32.totalorder %s27, 1
        %s433 = scalar_select %p432, %s27, 1
        %s434 = smul.addr %s433, 4
        %s435 = smul.addr %s434, 8
        %s436 = scalar_lea.vmem %s3, %s435
        %s437 = smul.u32 2, %s28
        %v438 = vld [vmem:[%s436] sm:$0xff]
        %v439 = vld [vmem:[%s436 + $0x8] sm:$0xff]
        %v440 = vld [vmem:[%s436 + $0x10] sm:$0xff]
        %v441 = vld [vmem:[%s436 + $0x18] sm:$0xff]
        %v442 = vld [vmem:[%s421] sm:$0xff]
        %v443 = vld [vmem:[%s421 + $0x8] sm:$0xff]
        %v444 = vld [vmem:[%s421 + $0x10] sm:$0xff]
        %v445 = vld [vmem:[%s421 + $0x18] sm:$0xff]
        %v446 = vld [vmem:[%s415] sm:$0x1f]
        %v447 = vld [vmem:[%s415 + $0x8] sm:$0x1f]
        %vm448 = vcmask 39936
        %v450 = vsel %vm448, %v442, 0
        %v453 = vsel %vm448, %v443, 0
        %v456 = vsel %vm448, %v444, 0
        %v459 = vsel %vm448, %v445, 0
        %vm461 = vcmask 1044480
        %v463 = vsel %vm461, %v446, 0
        %v466 = vsel %vm461, %v447, 0
        %468 = vmatprep.subr.mxu0 %v466
        %469 = vmatpush1.msra.mxu0 %v463
        %470 = vmatprep.subr.mxu0 0.0
        %471 = vmatpush1.msra.mxu0 0.0
        %472 = vmatprep.subr.mxu0 0.0
        %473 = vmatpush1.msra.mxu0 0.0
        %474 = vmatprep.subr.mxu0 0.0
        %475 = vmatpush1.msra.mxu0 0.0
        %476 = vmatprep.subr.mxu0 0.0
        %477 = vmatpush1.msra.mxu0 0.0
        %478 = vmatprep.subr.mxu0 0.0
        %479 = vmatpush1.msra.mxu0 0.0
        %480 = vmatprep.subr.mxu0 0.0
        %481 = vmatpush1.msra.mxu0 0.0
        %482 = vmatprep.subr.mxu0 0.0
        %483 = vmatpush1.msra.mxu0 0.0
        %484 = vmatprep.subr.mxu0 0.0
        %485 = vmatpush1.msra.mxu0 0.0
        %486 = vmatprep.subr.mxu0 0.0
        %487 = vmatpush1.msra.mxu0 0.0
        %488 = vmatprep.subr.mxu0 0.0
        %489 = vmatpush1.msra.mxu0 0.0
        %490 = vmatprep.subr.mxu0 0.0
        %491 = vmatpush1.msra.mxu0 0.0
        %492 = vmatprep.subr.mxu0 0.0
        %493 = vmatpush1.msra.mxu0 0.0
        %494 = vmatprep.subr.mxu0 0.0
        %495 = vmatpush1.msra.mxu0 0.0
        %496 = vmatprep.subr.mxu0 0.0
        %497 = vmatpush1.msra.mxu0 0.0
        %498 = vmatprep.subr.mxu0 0.0
        %499 = vmatpush1.msra.mxu0 0.0
        %500 = vmatprep.subr.mxu0 0.0
        %501 = vmatpush1.msra.mxu0 0.0
        %502 = vmatprep.subr.mxu0 0.0
        %503 = vmatpush1.msra.mxu0 0.0
        %504 = vmatprep.subr.mxu0 0.0
        %505 = vmatpush1.msra.mxu0 0.0
        %506 = vmatprep.subr.mxu0 0.0
        %507 = vmatpush1.msra.mxu0 0.0
        %508 = vmatprep.subr.mxu0 0.0
        %509 = vmatpush1.msra.mxu0 0.0
        %510 = vmatprep.subr.mxu0 0.0
        %511 = vmatpush1.msra.mxu0 0.0
        %512 = vmatprep.subr.mxu0 0.0
        %513 = vmatpush1.msra.mxu0 0.0
        %514 = vmatprep.subr.mxu0 0.0
        %515 = vmatpush1.msra.mxu0 0.0
        %516 = vmatprep.subr.mxu0 0.0
        %517 = vmatpush1.msra.mxu0 0.0
        %518 = vmatprep.subr.mxu0 0.0
        %519 = vmatpush1.msra.mxu0 0.0
        %520 = vmatprep.subr.mxu0 0.0
        %521 = vmatpush1.msra.mxu0 0.0
        %522 = vmatprep.subr.mxu0 0.0
        %523 = vmatpush1.msra.mxu0 0.0
        %524 = vmatprep.subr.mxu0 0.0
        %525 = vmatpush1.msra.mxu0 0.0
        %526 = vmatprep.subr.mxu0 0.0
        %527 = vmatpush1.msra.mxu0 0.0
        %528 = vmatprep.subr.mxu0 0.0
        %529 = vmatpush1.msra.mxu0 0.0
        %530 = vmatprep.subr.mxu0 0.0
        %531 = vmatpush1.msra.mxu0 0.0
        %532 = vmatprep.mubr.f32.mxu0 0.0
        %533 = vmatmul.mubr.f32.gmra.mrb[0].mxu0 %v450
        %v534 = vpop.f32.mrb[0].mxu0
        %v535 = vadd.f32 0.0, %v534
        %v536 = vpop.f32.mrb[0].mxu0
        %v537 = vadd.f32 0.0, %v536
        %538 = vmatprep.mubr.f32.mxu0 0.0
        %539 = vmatmul.mubr.f32.gmra.mrb[0].mxu0 %v453
        %v540 = vpop.f32.mrb[0].mxu0
        %v541 = vadd.f32 0.0, %v540
        %v542 = vpop.f32.mrb[0].mxu0
        %v543 = vadd.f32 0.0, %v542
        %544 = vmatprep.mubr.f32.mxu0 0.0
        %545 = vmatmul.mubr.f32.gmra.mrb[0].mxu0 %v456
        %v546 = vpop.f32.mrb[0].mxu0
        %v547 = vadd.f32 0.0, %v546
        %v548 = vpop.f32.mrb[0].mxu0
        %v549 = vadd.f32 0.0, %v548
        %550 = vmatprep.mubr.f32.mxu0 0.0
        %551 = vmatmul.mubr.f32.gmra.mrb[0].mxu0 %v459
        %v552 = vpop.f32.mrb[0].mxu0
        %v553 = vadd.f32 0.0, %v552
        %v554 = vpop.f32.mrb[0].mxu0
        %v555 = vadd.f32 0.0, %v554
        %556 = vdwg.mxu0
        %v557 = vmax.f32 %v535, 0.0
        %v558 = vmax.f32 %v537, 0.0
        %v559 = vmax.f32 %v541, 0.0
        %v560 = vmax.f32 %v543, 0.0
        %v561 = vmax.f32 %v547, 0.0
        %v562 = vmax.f32 %v549, 0.0
        %v563 = vmax.f32 %v553, 0.0
        %v564 = vmax.f32 %v555, 0.0
        %v565 = vlaneseq
        %v566 = vshrl.u32 %v565, 7
        %v567 = vadd.s32 %v566, 8
        %v568 = vadd.s32 %v566, 16
        %v569 = vadd.s32 %v566, 24
        %v578 = vand.u32 %v557, 4294967264
        %v579 = vand.u32 %v558, 4294967264
        %v580 = vand.u32 %v559, 4294967264
        %v581 = vand.u32 %v560, 4294967264
        %v582 = vand.u32 %v561, 4294967264
        %v583 = vand.u32 %v562, 4294967264
        %v584 = vand.u32 %v563, 4294967264
        %v585 = vand.u32 %v564, 4294967264
        %v586 = vor.u32 %v578, %v566
        %v587 = vor.u32 %v579, %v566
        %v588 = vor.u32 %v580, %v567
        %v589 = vor.u32 %v581, %v567
        %v590 = vor.u32 %v582, %v568
        %v591 = vor.u32 %v583, %v568
        %v592 = vor.u32 %v584, %v569
        %v593 = vor.u32 %v585, %v569
        %vm594 = vcmp.lt.s32.totalorder %v586, %v590
        %v595 = vsel %vm594, %v586, %v590
        %vm596 = vcmp.lt.s32.totalorder %v588, %v592
        %v597 = vsel %vm596, %v588, %v592
        %vm598 = vcmp.lt.s32.totalorder %v595, %v597
        %v599 = vsel %vm598, %v595, %v597
        %v600 = vrot.slane %v599, 4
        %vm601 = vcmp.lt.s32.totalorder %v599, %v600
        %v602 = vsel %vm601, %v599, %v600
        %v603 = vrot.slane %v602, 2
        %vm604 = vcmp.lt.s32.totalorder %v602, %v603
        %v605 = vsel %vm604, %v602, %v603
        %v606 = vrot.slane %v605, 1
        %vm607 = vcmp.lt.s32.totalorder %v605, %v606
        %v608 = vsel %vm607, %v605, %v606
        %vm609 = vcmp.lt.s32.totalorder %v587, %v591
        %v610 = vsel %vm609, %v587, %v591
        %vm611 = vcmp.lt.s32.totalorder %v589, %v593
        %v612 = vsel %vm611, %v589, %v593
        %vm613 = vcmp.lt.s32.totalorder %v610, %v612
        %v614 = vsel %vm613, %v610, %v612
        %v615 = vrot.slane %v614, 4
        %vm616 = vcmp.lt.s32.totalorder %v614, %v615
        %v617 = vsel %vm616, %v614, %v615
        %v618 = vrot.slane %v617, 2
        %vm619 = vcmp.lt.s32.totalorder %v617, %v618
        %v620 = vsel %vm619, %v617, %v618
        %v621 = vrot.slane %v620, 1
        %vm622 = vcmp.lt.s32.totalorder %v620, %v621
        %v623 = vsel %vm622, %v620, %v621
        %vm624 = vcmp.eq.s32.totalorder %v586, %v608
        %vm625 = vcmp.eq.s32.totalorder %v587, %v623
        %vm626 = vcmp.eq.s32.totalorder %v588, %v608
        %vm627 = vcmp.eq.s32.totalorder %v589, %v623
        %vm628 = vcmp.eq.s32.totalorder %v590, %v608
        %vm629 = vcmp.eq.s32.totalorder %v591, %v623
        %vm630 = vcmp.eq.s32.totalorder %v592, %v608
        %vm631 = vcmp.eq.s32.totalorder %v593, %v623
        %v632 = vsel %vm624, 2147483647, %v586
        %v633 = vsel %vm625, 2147483647, %v587
        %v634 = vsel %vm626, 2147483647, %v588
        %v635 = vsel %vm627, 2147483647, %v589
        %v636 = vsel %vm628, 2147483647, %v590
        %v637 = vsel %vm629, 2147483647, %v591
        %v638 = vsel %vm630, 2147483647, %v592
        %v639 = vsel %vm631, 2147483647, %v593
        %vm640 = vcmp.lt.s32.totalorder %v632, %v636
        %v641 = vsel %vm640, %v632, %v636
        %vm642 = vcmp.lt.s32.totalorder %v634, %v638
        %v643 = vsel %vm642, %v634, %v638
        %vm644 = vcmp.lt.s32.totalorder %v641, %v643
        %v645 = vsel %vm644, %v641, %v643
        %v646 = vrot.slane %v645, 4
        %vm647 = vcmp.lt.s32.totalorder %v645, %v646
        %v648 = vsel %vm647, %v645, %v646
        %v649 = vrot.slane %v648, 2
        %vm650 = vcmp.lt.s32.totalorder %v648, %v649
        %v651 = vsel %vm650, %v648, %v649
        %v652 = vrot.slane %v651, 1
        %vm653 = vcmp.lt.s32.totalorder %v651, %v652
        %v654 = vsel %vm653, %v651, %v652
        %vm655 = vcmp.lt.s32.totalorder %v633, %v637
        %v656 = vsel %vm655, %v633, %v637
        %vm657 = vcmp.lt.s32.totalorder %v635, %v639
        %v658 = vsel %vm657, %v635, %v639
        %vm659 = vcmp.lt.s32.totalorder %v656, %v658
        %v660 = vsel %vm659, %v656, %v658
        %v661 = vrot.slane %v660, 4
        %vm662 = vcmp.lt.s32.totalorder %v660, %v661
        %v663 = vsel %vm662, %v660, %v661
        %v664 = vrot.slane %v663, 2
        %vm665 = vcmp.lt.s32.totalorder %v663, %v664
        %v666 = vsel %vm665, %v663, %v664
        %v667 = vrot.slane %v666, 1
        %vm668 = vcmp.lt.s32.totalorder %v666, %v667
        %v669 = vsel %vm668, %v666, %v667
        %vm670 = vcmp.eq.s32.totalorder %v632, %v654
        %vm671 = vcmp.eq.s32.totalorder %v633, %v669
        %vm672 = vcmp.eq.s32.totalorder %v634, %v654
        %vm673 = vcmp.eq.s32.totalorder %v635, %v669
        %vm674 = vcmp.eq.s32.totalorder %v636, %v654
        %vm675 = vcmp.eq.s32.totalorder %v637, %v669
        %vm676 = vcmp.eq.s32.totalorder %v638, %v654
        %vm677 = vcmp.eq.s32.totalorder %v639, %v669
        %v678 = vsel %vm670, 2147483647, %v632
        %v679 = vsel %vm671, 2147483647, %v633
        %v680 = vsel %vm672, 2147483647, %v634
        %v681 = vsel %vm673, 2147483647, %v635
        %v682 = vsel %vm674, 2147483647, %v636
        %v683 = vsel %vm675, 2147483647, %v637
        %v684 = vsel %vm676, 2147483647, %v638
        %v685 = vsel %vm677, 2147483647, %v639
        %vm686 = vcmp.lt.s32.totalorder %v678, %v682
        %v687 = vsel %vm686, %v678, %v682
        %vm688 = vcmp.lt.s32.totalorder %v680, %v684
        %v689 = vsel %vm688, %v680, %v684
        %vm690 = vcmp.lt.s32.totalorder %v687, %v689
        %v691 = vsel %vm690, %v687, %v689
        %v692 = vrot.slane %v691, 4
        %vm693 = vcmp.lt.s32.totalorder %v691, %v692
        %v694 = vsel %vm693, %v691, %v692
        %v695 = vrot.slane %v694, 2
        %vm696 = vcmp.lt.s32.totalorder %v694, %v695
        %v697 = vsel %vm696, %v694, %v695
        %v698 = vrot.slane %v697, 1
        %vm699 = vcmp.lt.s32.totalorder %v697, %v698
        %v700 = vsel %vm699, %v697, %v698
        %vm701 = vcmp.lt.s32.totalorder %v679, %v683
        %v702 = vsel %vm701, %v679, %v683
        %vm703 = vcmp.lt.s32.totalorder %v681, %v685
        %v704 = vsel %vm703, %v681, %v685
        %vm705 = vcmp.lt.s32.totalorder %v702, %v704
        %v706 = vsel %vm705, %v702, %v704
        %v707 = vrot.slane %v706, 4
        %vm708 = vcmp.lt.s32.totalorder %v706, %v707
        %v709 = vsel %vm708, %v706, %v707
        %v710 = vrot.slane %v709, 2
        %vm711 = vcmp.lt.s32.totalorder %v709, %v710
        %v712 = vsel %vm711, %v709, %v710
        %v713 = vrot.slane %v712, 1
        %vm714 = vcmp.lt.s32.totalorder %v712, %v713
        %v715 = vsel %vm714, %v712, %v713
        %vm716 = vcmp.eq.s32.totalorder %v678, %v700
        %vm717 = vcmp.eq.s32.totalorder %v679, %v715
        %vm718 = vcmp.eq.s32.totalorder %v680, %v700
        %vm719 = vcmp.eq.s32.totalorder %v681, %v715
        %vm720 = vcmp.eq.s32.totalorder %v682, %v700
        %vm721 = vcmp.eq.s32.totalorder %v683, %v715
        %vm722 = vcmp.eq.s32.totalorder %v684, %v700
        %vm723 = vcmp.eq.s32.totalorder %v685, %v715
        %v724 = vand.u32 %v608, 4294967264
        %v725 = vand.u32 %v623, 4294967264
        %v728 = vand.u32 %v654, 4294967264
        %v729 = vand.u32 %v669, 4294967264
        %v732 = vand.u32 %v700, 4294967264
        %v733 = vand.u32 %v715, 4294967264
        %v736 = vadd.f32 %v724, 1e-08
        %v737 = vadd.f32 %v725, 1e-08
        %v738 = vrcp.pop %v736
        %v739 = vmul.f32 1.0, %v738
        %v740 = vrcp.pop %v737
        %v741 = vmul.f32 1.0, %v740
        %v742 = vadd.f32 %v728, 1e-08
        %v743 = vadd.f32 %v729, 1e-08
        %v744 = vrcp.pop %v742
        %v745 = vmul.f32 1.0, %v744
        %v746 = vrcp.pop %v743
        %v747 = vmul.f32 1.0, %v746
        %v748 = vadd.f32 %v732, 1e-08
        %v749 = vadd.f32 %v733, 1e-08
        %v750 = vrcp.pop %v748
        %v751 = vmul.f32 1.0, %v750
        %v752 = vrcp.pop %v749
        %v753 = vmul.f32 1.0, %v752
        %v754 = vadd.f32 %v739, %v745
        %v755 = vadd.f32 %v741, %v747
        %v756 = vadd.f32 %v754, %v751
        %v757 = vadd.f32 %v755, %v753
        %v758 = vrcp.pop %v756
        %v759 = vmul.f32 1.0, %v758
        %v760 = vrcp.pop %v757
        %v761 = vmul.f32 1.0, %v760
        %v762 = vmul.f32 %v739, %v759
        %v763 = vmul.f32 %v741, %v761
        %v764 = vmul.f32 %v745, %v759
        %v765 = vmul.f32 %v747, %v761
        %v766 = vmul.f32 %v751, %v759
        %v767 = vmul.f32 %v753, %v761
        %v768 = vsel %vm624, %v762, 0.0
        %v769 = vsel %vm625, %v763, 0.0
        %v770 = vsel %vm626, %v762, 0.0
        %v771 = vsel %vm627, %v763, 0.0
        %v772 = vsel %vm628, %v762, 0.0
        %v773 = vsel %vm629, %v763, 0.0
        %v774 = vsel %vm630, %v762, 0.0
        %v775 = vsel %vm631, %v763, 0.0
        %v776 = vsel %vm670, %v764, 0.0
        %v777 = vsel %vm671, %v765, 0.0
        %v778 = vsel %vm672, %v764, 0.0
        %v779 = vsel %vm673, %v765, 0.0
        %v780 = vsel %vm674, %v764, 0.0
        %v781 = vsel %vm675, %v765, 0.0
        %v782 = vsel %vm676, %v764, 0.0
        %v783 = vsel %vm677, %v765, 0.0
        %v784 = vadd.f32 %v768, %v776
        %v785 = vadd.f32 %v769, %v777
        %v786 = vadd.f32 %v770, %v778
        %v787 = vadd.f32 %v771, %v779
        %v788 = vadd.f32 %v772, %v780
        %v789 = vadd.f32 %v773, %v781
        %v790 = vadd.f32 %v774, %v782
        %v791 = vadd.f32 %v775, %v783
        %v792 = vsel %vm716, %v766, 0.0
        %v793 = vsel %vm717, %v767, 0.0
        %v794 = vsel %vm718, %v766, 0.0
        %v795 = vsel %vm719, %v767, 0.0
        %v796 = vsel %vm720, %v766, 0.0
        %v797 = vsel %vm721, %v767, 0.0
        %v798 = vsel %vm722, %v766, 0.0
        %v799 = vsel %vm723, %v767, 0.0
        %v800 = vadd.f32 %v784, %v792
        %v801 = vadd.f32 %v785, %v793
        %v802 = vadd.f32 %v786, %v794
        %v803 = vadd.f32 %v787, %v795
        %v804 = vadd.f32 %v788, %v796
        %v805 = vadd.f32 %v789, %v797
        %v806 = vadd.f32 %v790, %v798
        %v807 = vadd.f32 %v791, %v799
        %vm808 = vcmask 261120
        %v810 = vsel %vm808, %v438, 0
        %v813 = vsel %vm808, %v439, 0
        %v816 = vsel %vm808, %v440, 0
        %v819 = vsel %vm808, %v441, 0
        %821 = vmatprep.subr.mxu0 %v801
        %822 = vmatpush1.msra.mxu0 %v800
        %823 = vmatprep.subr.mxu0 %v803
        %824 = vmatpush1.msra.mxu0 %v802
        %825 = vmatprep.subr.mxu0 %v805
        %826 = vmatpush1.msra.mxu0 %v804
        %827 = vmatprep.subr.mxu0 %v807
        %828 = vmatpush1.msra.mxu0 %v806
        %829 = vmatprep.subr.mxu0 0.0
        %830 = vmatpush1.msra.mxu0 0.0
        %831 = vmatprep.subr.mxu0 0.0
        %832 = vmatpush1.msra.mxu0 0.0
        %833 = vmatprep.subr.mxu0 0.0
        %834 = vmatpush1.msra.mxu0 0.0
        %835 = vmatprep.subr.mxu0 0.0
        %836 = vmatpush1.msra.mxu0 0.0
        %837 = vmatprep.subr.mxu0 0.0
        %838 = vmatpush1.msra.mxu0 0.0
        %839 = vmatprep.subr.mxu0 0.0
        %840 = vmatpush1.msra.mxu0 0.0
        %841 = vmatprep.subr.mxu0 0.0
        %842 = vmatpush1.msra.mxu0 0.0
        %843 = vmatprep.subr.mxu0 0.0
        %844 = vmatpush1.msra.mxu0 0.0
        %845 = vmatprep.subr.mxu0 0.0
        %846 = vmatpush1.msra.mxu0 0.0
        %847 = vmatprep.subr.mxu0 0.0
        %848 = vmatpush1.msra.mxu0 0.0
        %849 = vmatprep.subr.mxu0 0.0
        %850 = vmatpush1.msra.mxu0 0.0
        %851 = vmatprep.subr.mxu0 0.0
        %852 = vmatpush1.msra.mxu0 0.0
        %853 = vmatprep.subr.mxu0 0.0
        %854 = vmatpush1.msra.mxu0 0.0
        %855 = vmatprep.subr.mxu0 0.0
        %856 = vmatpush1.msra.mxu0 0.0
        %857 = vmatprep.subr.mxu0 0.0
        %858 = vmatpush1.msra.mxu0 0.0
        %859 = vmatprep.subr.mxu0 0.0
        %860 = vmatpush1.msra.mxu0 0.0
        %861 = vmatprep.subr.mxu0 0.0
        %862 = vmatpush1.msra.mxu0 0.0
        %863 = vmatprep.subr.mxu0 0.0
        %864 = vmatpush1.msra.mxu0 0.0
        %865 = vmatprep.subr.mxu0 0.0
        %866 = vmatpush1.msra.mxu0 0.0
        %867 = vmatprep.subr.mxu0 0.0
        %868 = vmatpush1.msra.mxu0 0.0
        %869 = vmatprep.subr.mxu0 0.0
        %870 = vmatpush1.msra.mxu0 0.0
        %871 = vmatprep.subr.mxu0 0.0
        %872 = vmatpush1.msra.mxu0 0.0
        %873 = vmatprep.subr.mxu0 0.0
        %874 = vmatpush1.msra.mxu0 0.0
        %875 = vmatprep.subr.mxu0 0.0
        %876 = vmatpush1.msra.mxu0 0.0
        %877 = vmatprep.subr.mxu0 0.0
        %878 = vmatpush1.msra.mxu0 0.0
        %879 = vmatprep.subr.mxu0 0.0
        %880 = vmatpush1.msra.mxu0 0.0
        %881 = vmatprep.subr.mxu0 0.0
        %882 = vmatpush1.msra.mxu0 0.0
        %883 = vmatprep.subr.mxu0 0.0
        %884 = vmatpush1.msra.mxu0 0.0
        %885 = vmatprep.mubr.f32.mxu0 0.0
        %886 = vmatmul.mubr.f32.gmra.mrb[0].mxu0 %v810
        %v887 = vpop.f32.mrb[0].mxu0
        %v888 = vadd.f32 0.0, %v887
        %v889 = vpop.f32.mrb[0].mxu0
        %v890 = vadd.f32 0.0, %v889
        %891 = vmatprep.mubr.f32.mxu0 0.0
        %892 = vmatmul.mubr.f32.gmra.mrb[0].mxu0 %v813
        %v893 = vpop.f32.mrb[0].mxu0
        %v894 = vadd.f32 0.0, %v893
        %v895 = vpop.f32.mrb[0].mxu0
        %v896 = vadd.f32 0.0, %v895
        %897 = vmatprep.mubr.f32.mxu0 0.0
        %898 = vmatmul.mubr.f32.gmra.mrb[0].mxu0 %v816
        %v899 = vpop.f32.mrb[0].mxu0
        %v900 = vadd.f32 0.0, %v899
        %v901 = vpop.f32.mrb[0].mxu0
        %v902 = vadd.f32 0.0, %v901
        %903 = vmatprep.mubr.f32.mxu0 0.0
        %904 = vmatmul.mubr.f32.gmra.mrb[0].mxu0 %v819
        %v905 = vpop.f32.mrb[0].mxu0
        %v906 = vadd.f32 0.0, %v905
        %v907 = vpop.f32.mrb[0].mxu0
        %v908 = vadd.f32 0.0, %v907
        %909 = vdwg.mxu0
        %v910 = vld [vmem:[%s4] sm:$0xff]
        %v911 = vld [vmem:[%s4 + $0x8] sm:$0xff]
        %v912 = vld [vmem:[%s4 + $0x10] sm:$0xff]
        %v913 = vld [vmem:[%s4 + $0x18] sm:$0xff]
        %v914 = vld [vmem:[%s4 + $0x20] sm:$0xff]
        %v915 = vld [vmem:[%s4 + $0x28] sm:$0xff]
        %v916 = vld [vmem:[%s4 + $0x30] sm:$0xff]
        %v917 = vld [vmem:[%s4 + $0x38] sm:$0xff]
        %v918 = vld [vmem:[%s430] sm:$0xff]
        %v919 = vld [vmem:[%s430 + $0x8] sm:$0xff]
        %v920 = vld [vmem:[%s430 + $0x10] sm:$0xff]
        %v921 = vld [vmem:[%s430 + $0x18] sm:$0xff]
        %v922 = vld [vmem:[%s5] sm:$0xff]
        %v923 = vld [vmem:[%s5 + $0x8] sm:$0xff]
        %v924 = vld [vmem:[%s5 + $0x10] sm:$0xff]
        %v925 = vld [vmem:[%s5 + $0x18] sm:$0xff]
        %v926 = vld [vmem:[%s5 + $0x20] sm:$0xff]
        %v927 = vld [vmem:[%s5 + $0x28] sm:$0xff]
        %v928 = vld [vmem:[%s5 + $0x30] sm:$0xff]
        %v929 = vld [vmem:[%s5 + $0x38] sm:$0xff]
        %v931 = vsel %vm808, %v922, 0
        %v934 = vsel %vm808, %v923, 0
        %v937 = vsel %vm808, %v924, 0
        %v940 = vsel %vm808, %v925, 0
        %v943 = vsel %vm808, %v926, 0
        %v946 = vsel %vm808, %v927, 0
        %v949 = vsel %vm808, %v928, 0
        %v952 = vsel %vm808, %v929, 0
        %954 = vmatprep.subr.mxu0 %v890
        %955 = vmatpush1.msra.mxu0 %v888
        %956 = vmatprep.subr.mxu0 %v896
        %957 = vmatpush1.msra.mxu0 %v894
        %958 = vmatprep.subr.mxu0 %v902
        %959 = vmatpush1.msra.mxu0 %v900
        %960 = vmatprep.subr.mxu0 %v908
        %961 = vmatpush1.msra.mxu0 %v906
        %962 = vmatprep.subr.mxu0 0.0
        %963 = vmatpush1.msra.mxu0 0.0
        %964 = vmatprep.subr.mxu0 0.0
        %965 = vmatpush1.msra.mxu0 0.0
        %966 = vmatprep.subr.mxu0 0.0
        %967 = vmatpush1.msra.mxu0 0.0
        %968 = vmatprep.subr.mxu0 0.0
        %969 = vmatpush1.msra.mxu0 0.0
        %970 = vmatprep.subr.mxu0 0.0
        %971 = vmatpush1.msra.mxu0 0.0
        %972 = vmatprep.subr.mxu0 0.0
        %973 = vmatpush1.msra.mxu0 0.0
        %974 = vmatprep.subr.mxu0 0.0
        %975 = vmatpush1.msra.mxu0 0.0
        %976 = vmatprep.subr.mxu0 0.0
        %977 = vmatpush1.msra.mxu0 0.0
        %978 = vmatprep.subr.mxu0 0.0
        %979 = vmatpush1.msra.mxu0 0.0
        %980 = vmatprep.subr.mxu0 0.0
        %981 = vmatpush1.msra.mxu0 0.0
        %982 = vmatprep.subr.mxu0 0.0
        %983 = vmatpush1.msra.mxu0 0.0
        %984 = vmatprep.subr.mxu0 0.0
        %985 = vmatpush1.msra.mxu0 0.0
        %986 = vmatprep.subr.mxu0 0.0
        %987 = vmatpush1.msra.mxu0 0.0
        %988 = vmatprep.subr.mxu0 0.0
        %989 = vmatpush1.msra.mxu0 0.0
        %990 = vmatprep.subr.mxu0 0.0
        %991 = vmatpush1.msra.mxu0 0.0
        %992 = vmatprep.subr.mxu0 0.0
        %993 = vmatpush1.msra.mxu0 0.0
        %994 = vmatprep.subr.mxu0 0.0
        %995 = vmatpush1.msra.mxu0 0.0
        %996 = vmatprep.subr.mxu0 0.0
        %997 = vmatpush1.msra.mxu0 0.0
        %998 = vmatprep.subr.mxu0 0.0
        %999 = vmatpush1.msra.mxu0 0.0
        %1000 = vmatprep.subr.mxu0 0.0
        %1001 = vmatpush1.msra.mxu0 0.0
        %1002 = vmatprep.subr.mxu0 0.0
        %1003 = vmatpush1.msra.mxu0 0.0
        %1004 = vmatprep.subr.mxu0 0.0
        %1005 = vmatpush1.msra.mxu0 0.0
        %1006 = vmatprep.subr.mxu0 0.0
        %1007 = vmatpush1.msra.mxu0 0.0
        %1008 = vmatprep.subr.mxu0 0.0
        %1009 = vmatpush1.msra.mxu0 0.0
        %1010 = vmatprep.subr.mxu0 0.0
        %1011 = vmatpush1.msra.mxu0 0.0
        %1012 = vmatprep.subr.mxu0 0.0
        %1013 = vmatpush1.msra.mxu0 0.0
        %1014 = vmatprep.subr.mxu0 0.0
        %1015 = vmatpush1.msra.mxu0 0.0
        %1016 = vmatprep.subr.mxu0 0.0
        %1017 = vmatpush1.msra.mxu0 0.0
        %1018 = vmatprep.mubr.f32.mxu0 0.0
        %1019 = vmatmul.mubr.f32.gmra.mrb[0].mxu0 %v931
        %v1020 = vpop.f32.mrb[0].mxu0
        %v1021 = vadd.f32 0.0, %v1020
        %v1022 = vpop.f32.mrb[0].mxu0
        %v1023 = vadd.f32 0.0, %v1022
        %1024 = vmatprep.mubr.f32.mxu0 0.0
        %1025 = vmatmul.mubr.f32.gmra.mrb[0].mxu0 %v934
        %v1026 = vpop.f32.mrb[0].mxu0
        %v1027 = vadd.f32 0.0, %v1026
        %v1028 = vpop.f32.mrb[0].mxu0
        %v1029 = vadd.f32 0.0, %v1028
        %1030 = vmatprep.mubr.f32.mxu0 0.0
        %1031 = vmatmul.mubr.f32.gmra.mrb[0].mxu0 %v937
        %v1032 = vpop.f32.mrb[0].mxu0
        %v1033 = vadd.f32 0.0, %v1032
        %v1034 = vpop.f32.mrb[0].mxu0
        %v1035 = vadd.f32 0.0, %v1034
        %1036 = vmatprep.mubr.f32.mxu0 0.0
        %1037 = vmatmul.mubr.f32.gmra.mrb[0].mxu0 %v940
        %v1038 = vpop.f32.mrb[0].mxu0
        %v1039 = vadd.f32 0.0, %v1038
        %v1040 = vpop.f32.mrb[0].mxu0
        %v1041 = vadd.f32 0.0, %v1040
        %1042 = vmatprep.mubr.f32.mxu0 0.0
        %1043 = vmatmul.mubr.f32.gmra.mrb[0].mxu0 %v943
        %v1044 = vpop.f32.mrb[0].mxu0
        %v1045 = vadd.f32 0.0, %v1044
        %v1046 = vpop.f32.mrb[0].mxu0
        %v1047 = vadd.f32 0.0, %v1046
        %1048 = vmatprep.mubr.f32.mxu0 0.0
        %1049 = vmatmul.mubr.f32.gmra.mrb[0].mxu0 %v946
        %v1050 = vpop.f32.mrb[0].mxu0
        %v1051 = vadd.f32 0.0, %v1050
        %v1052 = vpop.f32.mrb[0].mxu0
        %v1053 = vadd.f32 0.0, %v1052
        %1054 = vmatprep.mubr.f32.mxu0 0.0
        %1055 = vmatmul.mubr.f32.gmra.mrb[0].mxu0 %v949
        %v1056 = vpop.f32.mrb[0].mxu0
        %v1057 = vadd.f32 0.0, %v1056
        %v1058 = vpop.f32.mrb[0].mxu0
        %v1059 = vadd.f32 0.0, %v1058
        %1060 = vmatprep.mubr.f32.mxu0 0.0
        %1061 = vmatmul.mubr.f32.gmra.mrb[0].mxu0 %v952
        %v1062 = vpop.f32.mrb[0].mxu0
        %v1063 = vadd.f32 0.0, %v1062
        %v1064 = vpop.f32.mrb[0].mxu0
        %v1065 = vadd.f32 0.0, %v1064
        %1066 = vdwg.mxu0
        %vm1067 = vcmask 130048
        %v1069 = vsel %vm1067, %v910, 0
        %v1072 = vsel %vm1067, %v911, 0
        %v1075 = vsel %vm1067, %v912, 0
        %v1078 = vsel %vm1067, %v913, 0
        %v1081 = vsel %vm1067, %v914, 0
        %v1084 = vsel %vm1067, %v915, 0
        %v1087 = vsel %vm1067, %v916, 0
        %v1090 = vsel %vm1067, %v917, 0
        %1092 = vmatprep.subr.mxu0 %v919
        %1093 = vmatpush1.msra.mxu0 %v918
        %1094 = vmatprep.subr.mxu0 %v921
        %1095 = vmatpush1.msra.mxu0 %v920
        %1096 = vmatprep.subr.mxu0 0.0
        %1097 = vmatpush1.msra.mxu0 0.0
        %1098 = vmatprep.subr.mxu0 0.0
        %1099 = vmatpush1.msra.mxu0 0.0
        %1100 = vmatprep.subr.mxu0 0.0
        %1101 = vmatpush1.msra.mxu0 0.0
        %1102 = vmatprep.subr.mxu0 0.0
        %1103 = vmatpush1.msra.mxu0 0.0
        %1104 = vmatprep.subr.mxu0 0.0
        %1105 = vmatpush1.msra.mxu0 0.0
        %1106 = vmatprep.subr.mxu0 0.0
        %1107 = vmatpush1.msra.mxu0 0.0
        %1108 = vmatprep.subr.mxu0 0.0
        %1109 = vmatpush1.msra.mxu0 0.0
        %1110 = vmatprep.subr.mxu0 0.0
        %1111 = vmatpush1.msra.mxu0 0.0
        %1112 = vmatprep.subr.mxu0 0.0
        %1113 = vmatpush1.msra.mxu0 0.0
        %1114 = vmatprep.subr.mxu0 0.0
        %1115 = vmatpush1.msra.mxu0 0.0
        %1116 = vmatprep.subr.mxu0 0.0
        %1117 = vmatpush1.msra.mxu0 0.0
        %1118 = vmatprep.subr.mxu0 0.0
        %1119 = vmatpush1.msra.mxu0 0.0
        %1120 = vmatprep.subr.mxu0 0.0
        %1121 = vmatpush1.msra.mxu0 0.0
        %1122 = vmatprep.subr.mxu0 0.0
        %1123 = vmatpush1.msra.mxu0 0.0
        %1124 = vmatprep.subr.mxu0 0.0
        %1125 = vmatpush1.msra.mxu0 0.0
        %1126 = vmatprep.subr.mxu0 0.0
        %1127 = vmatpush1.msra.mxu0 0.0
        %1128 = vmatprep.subr.mxu0 0.0
        %1129 = vmatpush1.msra.mxu0 0.0
        %1130 = vmatprep.subr.mxu0 0.0
        %1131 = vmatpush1.msra.mxu0 0.0
        %1132 = vmatprep.subr.mxu0 0.0
        %1133 = vmatpush1.msra.mxu0 0.0
        %1134 = vmatprep.subr.mxu0 0.0
        %1135 = vmatpush1.msra.mxu0 0.0
        %1136 = vmatprep.subr.mxu0 0.0
        %1137 = vmatpush1.msra.mxu0 0.0
        %1138 = vmatprep.subr.mxu0 0.0
        %1139 = vmatpush1.msra.mxu0 0.0
        %1140 = vmatprep.subr.mxu0 0.0
        %1141 = vmatpush1.msra.mxu0 0.0
        %1142 = vmatprep.subr.mxu0 0.0
        %1143 = vmatpush1.msra.mxu0 0.0
        %1144 = vmatprep.subr.mxu0 0.0
        %1145 = vmatpush1.msra.mxu0 0.0
        %1146 = vmatprep.subr.mxu0 0.0
        %1147 = vmatpush1.msra.mxu0 0.0
        %1148 = vmatprep.subr.mxu0 0.0
        %1149 = vmatpush1.msra.mxu0 0.0
        %1150 = vmatprep.subr.mxu0 0.0
        %1151 = vmatpush1.msra.mxu0 0.0
        %1152 = vmatprep.subr.mxu0 0.0
        %1153 = vmatpush1.msra.mxu0 0.0
        %1154 = vmatprep.subr.mxu0 0.0
        %1155 = vmatpush1.msra.mxu0 0.0
        %1156 = vmatprep.mubr.f32.mxu0 0.0
        %1157 = vmatmul.mubr.f32.gmra.mrb[0].mxu0 %v1069
        %v1158 = vpop.f32.mrb[0].mxu0
        %v1159 = vadd.f32 %v1021, %v1158
        %v1160 = vpop.f32.mrb[0].mxu0
        %v1161 = vadd.f32 %v1023, %v1160
        %1162 = vmatprep.mubr.f32.mxu0 0.0
        %1163 = vmatmul.mubr.f32.gmra.mrb[0].mxu0 %v1072
        %v1164 = vpop.f32.mrb[0].mxu0
        %v1165 = vadd.f32 %v1027, %v1164
        %v1166 = vpop.f32.mrb[0].mxu0
        %v1167 = vadd.f32 %v1029, %v1166
        %1168 = vmatprep.mubr.f32.mxu0 0.0
        %1169 = vmatmul.mubr.f32.gmra.mrb[0].mxu0 %v1075
        %v1170 = vpop.f32.mrb[0].mxu0
        %v1171 = vadd.f32 %v1033, %v1170
        %v1172 = vpop.f32.mrb[0].mxu0
        %v1173 = vadd.f32 %v1035, %v1172
        %1174 = vmatprep.mubr.f32.mxu0 0.0
        %1175 = vmatmul.mubr.f32.gmra.mrb[0].mxu0 %v1078
        %v1176 = vpop.f32.mrb[0].mxu0
        %v1177 = vadd.f32 %v1039, %v1176
        %v1178 = vpop.f32.mrb[0].mxu0
        %v1179 = vadd.f32 %v1041, %v1178
        %1180 = vmatprep.mubr.f32.mxu0 0.0
        %1181 = vmatmul.mubr.f32.gmra.mrb[0].mxu0 %v1081
        %v1182 = vpop.f32.mrb[0].mxu0
        %v1183 = vadd.f32 %v1045, %v1182
        %v1184 = vpop.f32.mrb[0].mxu0
        %v1185 = vadd.f32 %v1047, %v1184
        %1186 = vmatprep.mubr.f32.mxu0 0.0
        %1187 = vmatmul.mubr.f32.gmra.mrb[0].mxu0 %v1084
        %v1188 = vpop.f32.mrb[0].mxu0
        %v1189 = vadd.f32 %v1051, %v1188
        %v1190 = vpop.f32.mrb[0].mxu0
        %v1191 = vadd.f32 %v1053, %v1190
        %1192 = vmatprep.mubr.f32.mxu0 0.0
        %1193 = vmatmul.mubr.f32.gmra.mrb[0].mxu0 %v1087
        %v1194 = vpop.f32.mrb[0].mxu0
        %v1195 = vadd.f32 %v1057, %v1194
        %v1196 = vpop.f32.mrb[0].mxu0
        %v1197 = vadd.f32 %v1059, %v1196
        %1198 = vmatprep.mubr.f32.mxu0 0.0
        %1199 = vmatmul.mubr.f32.gmra.mrb[0].mxu0 %v1090
        %v1200 = vpop.f32.mrb[0].mxu0
        %v1201 = vadd.f32 %v1063, %v1200
        %v1202 = vpop.f32.mrb[0].mxu0
        %v1203 = vadd.f32 %v1065, %v1202
        %1204 = vdwg.mxu0
        %v1205 = vld [vmem:[%s6] sm:$0xff]
        %v1206 = vld [vmem:[%s6 + $0x8] sm:$0xff]
        %v1207 = vld [vmem:[%s6 + $0x10] sm:$0xff]
        %v1208 = vld [vmem:[%s6 + $0x18] sm:$0xff]
        %v1209 = vld [vmem:[%s6 + $0x20] sm:$0xff]
        %v1210 = vld [vmem:[%s6 + $0x28] sm:$0xff]
        %v1211 = vld [vmem:[%s6 + $0x30] sm:$0xff]
        %v1212 = vld [vmem:[%s6 + $0x38] sm:$0xff]
        %1214 = vset.pattern.permute.xlu0 0
        %1215 = vperm.xlu0 %1214, %v1205
        %v1216 = vpop.permute.xlu0 %1215
        %1219 = vset.pattern.permute.xlu0 0
        %1220 = vperm.xlu0 %1219, %v1206
        %v1221 = vpop.permute.xlu0 %1220
        %1224 = vset.pattern.permute.xlu0 0
        %1225 = vperm.xlu0 %1224, %v1207
        %v1226 = vpop.permute.xlu0 %1225
        %1229 = vset.pattern.permute.xlu0 0
        %1230 = vperm.xlu0 %1229, %v1208
        %v1231 = vpop.permute.xlu0 %1230
        %1234 = vset.pattern.permute.xlu0 0
        %1235 = vperm.xlu0 %1234, %v1209
        %v1236 = vpop.permute.xlu0 %1235
        %1239 = vset.pattern.permute.xlu0 0
        %1240 = vperm.xlu0 %1239, %v1210
        %v1241 = vpop.permute.xlu0 %1240
        %1244 = vset.pattern.permute.xlu0 0
        %1245 = vperm.xlu0 %1244, %v1211
        %v1246 = vpop.permute.xlu0 %1245
        %1249 = vset.pattern.permute.xlu0 0
        %1250 = vperm.xlu0 %1249, %v1212
        %v1251 = vpop.permute.xlu0 %1250
        %v1253 = vadd.f32 %v1159, %v1216
        %v1254 = vadd.f32 %v1161, %v1216
        %v1255 = vadd.f32 %v1165, %v1221
        %v1256 = vadd.f32 %v1167, %v1221
        %v1257 = vadd.f32 %v1171, %v1226
        %v1258 = vadd.f32 %v1173, %v1226
        %v1259 = vadd.f32 %v1177, %v1231
        %v1260 = vadd.f32 %v1179, %v1231
        %v1261 = vadd.f32 %v1183, %v1236
        %v1262 = vadd.f32 %v1185, %v1236
        %v1263 = vadd.f32 %v1189, %v1241
        %v1264 = vadd.f32 %v1191, %v1241
        %v1265 = vadd.f32 %v1195, %v1246
        %v1266 = vadd.f32 %v1197, %v1246
        %v1267 = vadd.f32 %v1201, %v1251
        %v1268 = vadd.f32 %v1203, %v1251
        %v1269 = vmax.f32 %v1253, 0.0
        %v1270 = vmax.f32 %v1254, 0.0
        %v1271 = vmax.f32 %v1255, 0.0
        %v1272 = vmax.f32 %v1256, 0.0
        %v1273 = vmax.f32 %v1257, 0.0
        %v1274 = vmax.f32 %v1258, 0.0
        %v1275 = vmax.f32 %v1259, 0.0
        %v1276 = vmax.f32 %v1260, 0.0
        %v1277 = vmax.f32 %v1261, 0.0
        %v1278 = vmax.f32 %v1262, 0.0
        %v1279 = vmax.f32 %v1263, 0.0
        %v1280 = vmax.f32 %v1264, 0.0
        %v1281 = vmax.f32 %v1265, 0.0
        %v1282 = vmax.f32 %v1266, 0.0
        %v1283 = vmax.f32 %v1267, 0.0
        %v1284 = vmax.f32 %v1268, 0.0
        %v1285 = vld [vmem:[%s7] sm:$0xff]
        %v1286 = vld [vmem:[%s7 + $0x8] sm:$0xff]
        %v1287 = vld [vmem:[%s7 + $0x10] sm:$0xff]
        %v1288 = vld [vmem:[%s7 + $0x18] sm:$0xff]
        %v1289 = vld [vmem:[%s8] sm:$0xff]
        %v1290 = vld [vmem:[%s8 + $0x8] sm:$0xff]
        %v1291 = vld [vmem:[%s8 + $0x10] sm:$0xff]
        %v1292 = vld [vmem:[%s8 + $0x18] sm:$0xff]
        %1294 = vset.pattern.permute.xlu0 0
        %1295 = vperm.xlu0 %1294, %v1289
        %v1296 = vpop.permute.xlu0 %1295
        %1299 = vset.pattern.permute.xlu0 0
        %1300 = vperm.xlu0 %1299, %v1290
        %v1301 = vpop.permute.xlu0 %1300
        %1304 = vset.pattern.permute.xlu0 0
        %1305 = vperm.xlu0 %1304, %v1291
        %v1306 = vpop.permute.xlu0 %1305
        %1309 = vset.pattern.permute.xlu0 0
        %1310 = vperm.xlu0 %1309, %v1292
        %v1311 = vpop.permute.xlu0 %1310
        %vm1313 = vcmask 523264
        %v1315 = vsel %vm1313, %v1285, 0
        %v1318 = vsel %vm1313, %v1286, 0
        %v1321 = vsel %vm1313, %v1287, 0
        %v1324 = vsel %vm1313, %v1288, 0
        %1326 = vmatprep.subr.mxu0 %v1270
        %1327 = vmatpush1.msra.mxu0 %v1269
        %1328 = vmatprep.subr.mxu0 %v1272
        %1329 = vmatpush1.msra.mxu0 %v1271
        %1330 = vmatprep.subr.mxu0 %v1274
        %1331 = vmatpush1.msra.mxu0 %v1273
        %1332 = vmatprep.subr.mxu0 %v1276
        %1333 = vmatpush1.msra.mxu0 %v1275
        %1334 = vmatprep.subr.mxu0 %v1278
        %1335 = vmatpush1.msra.mxu0 %v1277
        %1336 = vmatprep.subr.mxu0 %v1280
        %1337 = vmatpush1.msra.mxu0 %v1279
        %1338 = vmatprep.subr.mxu0 %v1282
        %1339 = vmatpush1.msra.mxu0 %v1281
        %1340 = vmatprep.subr.mxu0 %v1284
        %1341 = vmatpush1.msra.mxu0 %v1283
        %1342 = vmatprep.subr.mxu0 0.0
        %1343 = vmatpush1.msra.mxu0 0.0
        %1344 = vmatprep.subr.mxu0 0.0
        %1345 = vmatpush1.msra.mxu0 0.0
        %1346 = vmatprep.subr.mxu0 0.0
        %1347 = vmatpush1.msra.mxu0 0.0
        %1348 = vmatprep.subr.mxu0 0.0
        %1349 = vmatpush1.msra.mxu0 0.0
        %1350 = vmatprep.subr.mxu0 0.0
        %1351 = vmatpush1.msra.mxu0 0.0
        %1352 = vmatprep.subr.mxu0 0.0
        %1353 = vmatpush1.msra.mxu0 0.0
        %1354 = vmatprep.subr.mxu0 0.0
        %1355 = vmatpush1.msra.mxu0 0.0
        %1356 = vmatprep.subr.mxu0 0.0
        %1357 = vmatpush1.msra.mxu0 0.0
        %1358 = vmatprep.subr.mxu0 0.0
        %1359 = vmatpush1.msra.mxu0 0.0
        %1360 = vmatprep.subr.mxu0 0.0
        %1361 = vmatpush1.msra.mxu0 0.0
        %1362 = vmatprep.subr.mxu0 0.0
        %1363 = vmatpush1.msra.mxu0 0.0
        %1364 = vmatprep.subr.mxu0 0.0
        %1365 = vmatpush1.msra.mxu0 0.0
        %1366 = vmatprep.subr.mxu0 0.0
        %1367 = vmatpush1.msra.mxu0 0.0
        %1368 = vmatprep.subr.mxu0 0.0
        %1369 = vmatpush1.msra.mxu0 0.0
        %1370 = vmatprep.subr.mxu0 0.0
        %1371 = vmatpush1.msra.mxu0 0.0
        %1372 = vmatprep.subr.mxu0 0.0
        %1373 = vmatpush1.msra.mxu0 0.0
        %1374 = vmatprep.subr.mxu0 0.0
        %1375 = vmatpush1.msra.mxu0 0.0
        %1376 = vmatprep.subr.mxu0 0.0
        %1377 = vmatpush1.msra.mxu0 0.0
        %1378 = vmatprep.subr.mxu0 0.0
        %1379 = vmatpush1.msra.mxu0 0.0
        %1380 = vmatprep.subr.mxu0 0.0
        %1381 = vmatpush1.msra.mxu0 0.0
        %1382 = vmatprep.subr.mxu0 0.0
        %1383 = vmatpush1.msra.mxu0 0.0
        %1384 = vmatprep.subr.mxu0 0.0
        %1385 = vmatpush1.msra.mxu0 0.0
        %1386 = vmatprep.subr.mxu0 0.0
        %1387 = vmatpush1.msra.mxu0 0.0
        %1388 = vmatprep.subr.mxu0 0.0
        %1389 = vmatpush1.msra.mxu0 0.0
        %1390 = vmatprep.mubr.f32.mxu0 0.0
        %1391 = vmatmul.mubr.f32.gmra.mrb[0].mxu0 %v1315
        %v1392 = vpop.f32.mrb[0].mxu0
        %v1393 = vadd.f32 %v1296, %v1392
        %v1394 = vpop.f32.mrb[0].mxu0
        %v1395 = vadd.f32 %v1296, %v1394
        %1396 = vmatprep.mubr.f32.mxu0 0.0
        %1397 = vmatmul.mubr.f32.gmra.mrb[0].mxu0 %v1318
        %v1398 = vpop.f32.mrb[0].mxu0
        %v1399 = vadd.f32 %v1301, %v1398
        %v1400 = vpop.f32.mrb[0].mxu0
        %v1401 = vadd.f32 %v1301, %v1400
        %1402 = vmatprep.mubr.f32.mxu0 0.0
        %1403 = vmatmul.mubr.f32.gmra.mrb[0].mxu0 %v1321
        %v1404 = vpop.f32.mrb[0].mxu0
        %v1405 = vadd.f32 %v1306, %v1404
        %v1406 = vpop.f32.mrb[0].mxu0
        %v1407 = vadd.f32 %v1306, %v1406
        %1408 = vmatprep.mubr.f32.mxu0 0.0
        %1409 = vmatmul.mubr.f32.gmra.mrb[0].mxu0 %v1324
        %v1410 = vpop.f32.mrb[0].mxu0
        %v1411 = vadd.f32 %v1311, %v1410
        %v1412 = vpop.f32.mrb[0].mxu0
        %v1413 = vadd.f32 %v1311, %v1412
        %1414 = vdwg.mxu0
        %v1415 = vmax.f32 %v1393, 0.0
        %v1416 = vmax.f32 %v1395, 0.0
        %v1417 = vmax.f32 %v1399, 0.0
        %v1418 = vmax.f32 %v1401, 0.0
        %v1419 = vmax.f32 %v1405, 0.0
        %v1420 = vmax.f32 %v1407, 0.0
        %v1421 = vmax.f32 %v1411, 0.0
        %v1422 = vmax.f32 %v1413, 0.0
        %1423 = vst [vmem:[%s406] sm:$0xff] %v1415
        %1424 = vst [vmem:[%s406 + $0x8] sm:$0xff] %v1416
        %1425 = vst [vmem:[%s406 + $0x10] sm:$0xff] %v1417
        %1426 = vst [vmem:[%s406 + $0x18] sm:$0xff] %v1418
        %1427 = vst [vmem:[%s406 + $0x20] sm:$0xff] %v1419
        %1428 = vst [vmem:[%s406 + $0x28] sm:$0xff] %v1420
        %1429 = vst [vmem:[%s406 + $0x30] sm:$0xff] %v1421
        %1430 = vst [vmem:[%s406 + $0x38] sm:$0xff] %v1422
        %s1431 = sand.u32 %s258, 1
        %s1432 = scalar_lea.sflag [#allocation3], %s1431
        %s1433 = sand.u32 %s258, 1
        %s1434 = smul.addr %s1433, 64
        %s1435 = scalar_lea.vmem [#allocation2], %s1434
        // Predicated region
        $region57: #{tpu_custom_call.1} parent=55 // pred_check
          %p1436 = pneg %p268
        $region58: #{tpu_custom_call.1} parent=55 // pred_check_branch
          %1438 = sbr.rel (%p1436) target = $region60
        $region59: #{tpu_custom_call.1} parent=55 // pred_region
          %s1439 = smul.u32 2, %s28
          %s1441 = ssub.s32 1024, 1024
          %1442 = vsyncadd %s1432, %s1441
          %s1443 = smul.addr %s27, 8
          %s1444 = sadd.s32 %s1439, %s1443
          %s1445 = smul.addr %s1444, 128
          %s1446 = scalar_lea.hbm %s9, %s1445
          %s1447 = sshll.u32 %s1435, 4
          %s1448 = int_to_ptr.vmem [resolvable:$true] %s1447
          %1453 = dma.vmem_to_hbm [thread:$0]  %s1448, 1024, %s1446, %s1432, 256, 256, 16
        $region60: #{tpu_custom_call.1} parent=55 // pred_fallthru
          _
      $region56: #{tpu_custom_call.1} parent=5 // pred_fallthru
        _
      %p1454 = scmp.le.s32.totalorder 2, %s18
      // Predicated region
      $region61: #{tpu_custom_call.1} parent=5 // pred_check
        %p1455 = pneg %p1454
      $region62: #{tpu_custom_call.1} parent=5 // pred_check_branch
        %1457 = sbr.rel (%p1455) target = $region64
      $region63: #{tpu_custom_call.1} parent=5 // pred_region
        %s1458 = ssub.s32 %s18, 2
        // Predicated region
        $region65: #{tpu_custom_call.1} parent=63 // pred_check
          %p1459 = pneg %p274
        $region66: #{tpu_custom_call.1} parent=63 // pred_check_branch
          %1461 = sbr.rel (%p1459) target = $region68
        $region67: #{tpu_custom_call.1} parent=63 // pred_region
          %s1462 = sand.u32 %s259, 1
          %s1463 = scalar_lea.sflag [#allocation3], %s1462
          %s1464 = sand.u32 %s259, 1
          %s1465 = smul.addr %s1464, 64
          %s1466 = scalar_lea.vmem [#allocation2], %s1465
          %1467 = dma.done %s1463, 1024
        $region68: #{tpu_custom_call.1} parent=63 // pred_fallthru
          _
      $region64: #{tpu_custom_call.1} parent=5 // pred_fallthru
        _
    $region6: #{tpu_custom_call.1} parent=1 // loop_footer
      %s22 = sadd.s32 1, %s18
    $region7: #{tpu_custom_call.1} parent=1 // loop_footer_branch
      %17 = sbr.rel target = $region3
    $region8: #{tpu_custom_call.1} parent=1 // loop_exit
      _
    %1468 = vsyncpa [#allocation3], 1
    %s1469 = scalar_lea.sflag [#allocation3], 1
    %1470 = vsyncpa %s1469, 1

</llo_original>
